<compile_context>
chip_gen: v6e
topology: v6e:2x2x1
jax: 0.10.0
libtpu: 0.0.40
codegen_flags: <defaults>
</compile_context>

<pallas_src>
import math
import jax
import jax.numpy as jnp
from jax.experimental import pallas as pl
from jax.experimental.pallas import tpu as pltpu

NUM_TYPES = 4
NUM_FEATURES = 16          # "16x0e" scalar features
MUL = 8                    # irreps_hidden = "8x0e + 8x1o"
NUM_BASIS = 8
INV_NEURONS = 16
R_MAX = 6.0
POLY_P = 6.0
EDGE_TILE = 128            # max edges per grid step (multiple of 8)


def _silu(x):
    return x * jax.nn.sigmoid(x)


def _round_up(x, m):
    return -(-x // m) * m


# ----------------------------- weight slab layout ------------------------------
_SLAB_LAYOUT = (
    ('W_emb',      (NUM_TYPES, NUM_FEATURES)),                    # [4,16]
    ('c1_W_scl1',  (NUM_FEATURES, 2 * NUM_FEATURES)),             # [16,32] sc|l1
    ('c2_W_scl1',  (MUL, NUM_FEATURES + MUL)),                    # [8,24]  sc|l1s
    ('c2_ml1v',    (3 * MUL, 3 * MUL)),                           # [24,24] kron(I3,Wl1v)
    ('c2_Wl2',     (NUM_FEATURES, NUM_FEATURES)),                 # [16,16]
    ('Wo1',        (NUM_FEATURES, NUM_FEATURES // 2)),            # [16,8]
    ('c1_gamma_s', (1, 2 * MUL)),                                 # [1,16]
    ('c1_gamma_v', (1, 3 * MUL)),                                 # [1,24] m-major
    ('c2_gamma',   (1, NUM_FEATURES)),                            # [1,16]
    ('Wo2t',       (1, NUM_FEATURES // 2)),                       # [1,8]
    ('c1_Wf0',     (NUM_BASIS, INV_NEURONS)),                     # [8,16]
    ('c1_Wf1',     (INV_NEURONS, INV_NEURONS)),                   # [16,16]
    ('c1_Wf2x',    (INV_NEURONS, 4 * NUM_FEATURES)),              # [16,64] [w0|w1|w1|w1]
    ('c1_W1big',   (4 * NUM_FEATURES, NUM_FEATURES + 3 * MUL)),   # [64,40] blockdiag TP+lin2
    ('c2_Wf0',     (NUM_BASIS, INV_NEURONS)),                     # [8,16]
    ('c2_Wf1',     (INV_NEURONS, INV_NEURONS)),                   # [16,16]
    ('c2_Wf2x',    (INV_NEURONS, 4 * MUL)),                       # [16,32] [wA|wB|wB|wB]
    ('c2_R',       (4 * MUL, 2 * MUL)),                           # [32,16] m-sum structure
)


def _slab_offsets():
    offs, row = {}, 0
    for name, (r, c) in _SLAB_LAYOUT:
        offs[name] = (row, r, c)
        row += _round_up(r, 8)
    return offs, row


_SLAB_OFFS, _SLAB_ROWS = _slab_offsets()
_SLAB_COLS = max(c for _, (_, c) in _SLAB_LAYOUT)   # 64


# ------------------------------- fused kernel ----------------------------------
def _make_kernel(n_pad, te, n_tiles, e_actual):
    sqrt3 = math.sqrt(3.0)
    f32 = jnp.float32

    def mm(a, b):
        return jnp.dot(a, b, preferred_element_type=f32)

    def kernel(src_ref, dst_ref,                       # scalar-prefetch (SMEM)
               onehot_ref, vec_ref, wslab_ref,         # inputs (VMEM)
               out_ref,                                # output (VMEM)
               emb_s, sc1_s, sc2_s, gtab, acc, gbuf, efbuf):   # scratch
        p = pl.program_id(0)   # 0: conv1 edge pass, 1: conv2 edge pass
        t = pl.program_id(1)   # edge tile

        def W(name):
            r0, nr, nc = _SLAB_OFFS[name]
            return wslab_ref[r0:r0 + nr, :nc]

        # ---------------- node phase A: embedding + conv1 node linears --------
        @pl.when(jnp.logical_and(p == 0, t == 0))
        def _():
            emb = mm(onehot_ref[...], W('W_emb'))                     # [N,16]
            emb_s[...] = emb
            both1 = mm(emb, W('c1_W_scl1'))                           # [N,32]
            sc1_s[...] = both1[:, :NUM_FEATURES]
            gtab[...] = jnp.concatenate(
                [both1[:, NUM_FEATURES:2 * NUM_FEATURES],
                 jnp.zeros((n_pad, NUM_FEATURES), f32)], axis=1)      # [N,32]
            acc[...] = jnp.zeros_like(acc)

        # ---------------- node phase B: conv1 finalize + gate + conv2 linears -
        @pl.when(jnp.logical_and(p == 1, t == 0))
        def _():
            nsum = acc[...]                                           # [N,40]
            out_s = nsum[:, :NUM_FEATURES] + sc1_s[...]               # [N,16]
            out_v = nsum[:, NUM_FEATURES:]                            # [N,24] m-major
            eps = 1e-5
            rs = jax.lax.rsqrt(jnp.mean(out_s * out_s, axis=-1, keepdims=True) + eps)
            rv = jax.lax.rsqrt(jnp.mean(out_v * out_v, axis=-1, keepdims=True) + eps)
            ns1 = out_s * rs * W('c1_gamma_s')
            nv1 = out_v * rv * W('c1_gamma_v')
            hs = _silu(ns1[:, :MUL])                                  # scalars [N,8]
            gates = _silu(ns1[:, MUL:2 * MUL])                        # gates   [N,8]
            hv = nv1 * jnp.concatenate([gates, gates, gates], axis=1)  # [N,24]
            both2 = mm(hs, W('c2_W_scl1'))                            # [N,24]
            sc2_s[...] = both2[:, :NUM_FEATURES]
            h1v = mm(hv, W('c2_ml1v'))                                # [N,24]
            gtab[...] = jnp.concatenate(
                [both2[:, NUM_FEATURES:NUM_FEATURES + MUL], h1v], axis=1)  # [N,32]
            acc[...] = jnp.zeros_like(acc)

        # ---------------- per-tile edge geometry ------------------------------
        base = t * te
        v = vec_ref[...]                                              # [te,3]
        r2 = jnp.maximum(jnp.sum(v * v, axis=-1, keepdims=True), 1e-12)
        inv_r = jax.lax.rsqrt(r2)
        r = r2 * inv_r
        c = inv_r * sqrt3
        sh0 = v[:, 1:2] * c            # real SH l=1 components (y,z,x)/r*sqrt3
        sh1 = v[:, 2:3] * c
        sh2 = v[:, 0:1] * c
        freq = (jax.lax.broadcasted_iota(jnp.int32, (1, NUM_BASIS), 1).astype(f32)
                + 1.0) * (math.pi / R_MAX)
        bessel = jnp.sin(r * freq) * ((2.0 / R_MAX) * inv_r)          # [te,8]
        x = r * (1.0 / R_MAX)
        x2 = x * x
        xp = x2 * x2 * x2
        pp = POLY_P
        cpoly = (1.0 - (pp + 1.0) * (pp + 2.0) / 2.0 * xp
                 + pp * (pp + 2.0) * xp * x
                 - pp * (pp + 1.0) / 2.0 * xp * x2)
        edge_attr = bessel * jnp.where(x < 1.0, cpoly, 0.0)           # [te,8]
        eid = jax.lax.broadcasted_iota(jnp.int32, (te, 1), 0) + base
        vmask = (eid < e_actual).astype(f32)                          # pad-edge mask

        # ---------------- gather node rows for this tile (index-driven) -------
        def gather_body(i, carry):
            d = dst_ref[base + i]
            gbuf[pl.ds(i, 1), :] = gtab[pl.ds(d, 1), :]
            return carry
        jax.lax.fori_loop(0, te, gather_body, 0)

        # ---------------- conv1 edge compute (phase 0) ------------------------
        @pl.when(p == 0)
        def _():
            a0 = _silu(mm(edge_attr, W('c1_Wf0')))
            a1 = _silu(mm(a0, W('c1_Wf1')))
            wexp = mm(a1, W('c1_Wf2x'))                               # [te,64]
            hd = gbuf[:, :NUM_FEATURES]                               # dst features
            hsh = jnp.concatenate([hd, hd * sh0, hd * sh1, hd * sh2], axis=1)
            ef40 = mm(wexp * hsh, W('c1_W1big'))                      # [te,40]
            efbuf[...] = ef40 * vmask

        # ---------------- conv2 edge compute (phase 1) ------------------------
        @pl.when(p == 1)
        def _():
            a0 = _silu(mm(edge_attr, W('c2_Wf0')))
            a1 = _silu(mm(a0, W('c2_Wf1')))
            w2x = mm(a1, W('c2_Wf2x'))                                # [te,32]
            g = gbuf[...]                                             # [te,32]
            ones8 = jnp.ones((te, MUL), f32)
            shx = jnp.concatenate(
                [ones8, sh0 * ones8, sh1 * ones8, sh2 * ones8], axis=1)
            ef16 = mm(w2x * g * shx, W('c2_R'))                       # [te,16]
            efbuf[...] = jnp.concatenate(
                [ef16 * vmask, jnp.zeros((te, 3 * MUL), f32)], axis=1)

        # ---------------- scatter-add into resident node accumulator ----------
        def scatter_body(i, carry):
            s = src_ref[base + i]
            acc[pl.ds(s, 1), :] = acc[pl.ds(s, 1), :] + efbuf[pl.ds(i, 1), :]
            return carry
        jax.lax.fori_loop(0, te, scatter_body, 0)

        # ---------------- node phase C: conv2 finalize + output block ---------
        @pl.when(jnp.logical_and(p == 1, t == n_tiles - 1))
        def _():
            n2 = acc[:, :NUM_FEATURES]                                # [N,16]
            out2 = mm(n2, W('c2_Wl2')) + sc2_s[...]
            rr = jax.lax.rsqrt(jnp.mean(out2 * out2, axis=-1, keepdims=True) + 1e-5)
            node_scalars = out2 * rr * W('c2_gamma')
            o = emb_s[...] + _silu(node_scalars)
            hid = _silu(mm(o, W('Wo1')))                              # [N,8]
            energy = jax.lax.dot_general(
                W('Wo2t'), hid, (((1,), (1,)), ((), ())),
                preferred_element_type=f32)                           # [1,N] lane-dense
            out_ref[...] = energy

    return kernel


# -------------------------------- parameters -----------------------------------
def init_params(key):
    def nrm(k, shape):
        return jax.random.normal(k, shape, jnp.float32)
    ks = jax.random.split(key, 20)
    p = {}
    p['W_emb'] = nrm(ks[0], (NUM_TYPES, NUM_FEATURES))
    p['c1_Wsc'] = nrm(ks[1], (NUM_FEATURES, 2 * MUL))
    p['c1_Wl1'] = nrm(ks[2], (NUM_FEATURES, NUM_FEATURES))
    p['c1_Wf0'] = nrm(ks[3], (NUM_BASIS, INV_NEURONS))
    p['c1_Wf1'] = nrm(ks[4], (INV_NEURONS, INV_NEURONS))
    p['c1_Wf2a'] = nrm(ks[5], (INV_NEURONS, NUM_FEATURES))
    p['c1_Wf2b'] = nrm(ks[6], (INV_NEURONS, NUM_FEATURES))
    p['c1_Wl2s'] = nrm(ks[7], (NUM_FEATURES, 2 * MUL))
    p['c1_Wl2v'] = nrm(ks[8], (NUM_FEATURES, MUL))
    p['c1_gamma_s'] = jnp.ones((2 * MUL,), jnp.float32)
    p['c1_gamma_v'] = jnp.ones((MUL,), jnp.float32)
    p['c2_Wsc'] = nrm(ks[9], (MUL, NUM_FEATURES))
    p['c2_Wl1s'] = nrm(ks[10], (MUL, MUL))
    p['c2_Wl1v'] = nrm(ks[11], (MUL, MUL))
    p['c2_Wf0'] = nrm(ks[12], (NUM_BASIS, INV_NEURONS))
    p['c2_Wf1'] = nrm(ks[13], (INV_NEURONS, INV_NEURONS))
    p['c2_Wf2a'] = nrm(ks[14], (INV_NEURONS, MUL))
    p['c2_Wf2b'] = nrm(ks[15], (INV_NEURONS, MUL))
    p['c2_Wl2a'] = nrm(ks[16], (MUL, NUM_FEATURES))
    p['c2_Wl2b'] = nrm(ks[17], (MUL, NUM_FEATURES))
    p['c2_gamma'] = jnp.ones((NUM_FEATURES,), jnp.float32)
    p['Wo1'] = nrm(ks[18], (NUM_FEATURES, NUM_FEATURES // 2))
    p['Wo2'] = nrm(ks[19], (NUM_FEATURES // 2, 1))
    return p


def prepare_params(p):
    """Fold constant scales / CG factors / structure into the weights and pack
    everything into one lane-aligned VMEM slab (done once, outside the kernel)."""
    s16 = 1.0 / math.sqrt(NUM_FEATURES)
    s8 = 1.0 / math.sqrt(MUL)
    sB = 1.0 / math.sqrt(NUM_BASIS)
    sI = 1.0 / math.sqrt(INV_NEURONS)
    s3 = 1.0 / math.sqrt(3.0)
    eye3 = jnp.eye(3, dtype=jnp.float32)
    eye8 = jnp.eye(MUL, dtype=jnp.float32)

    w = {}
    w['W_emb'] = p['W_emb'] * (1.0 / math.sqrt(NUM_TYPES))
    w['c1_W_scl1'] = jnp.concatenate([p['c1_Wsc'] * s16, p['c1_Wl1'] * s16], axis=1)
    w['c2_W_scl1'] = jnp.concatenate([p['c2_Wsc'] * s8, p['c2_Wl1s'] * s8], axis=1)
    w['c2_ml1v'] = jnp.kron(eye3, p['c2_Wl1v']) * s8           # m-major block-diag
    w['c2_Wl2'] = jnp.concatenate([p['c2_Wl2a'], p['c2_Wl2b']], axis=0) * s16
    w['Wo1'] = p['Wo1'] * s16
    w['c1_gamma_s'] = p['c1_gamma_s'][None, :]
    w['c1_gamma_v'] = jnp.tile(p['c1_gamma_v'], 3)[None, :]     # m-major
    w['c2_gamma'] = p['c2_gamma'][None, :]
    w['Wo2t'] = (p['Wo2'] * (1.0 / math.sqrt(NUM_FEATURES // 2))).T
    w['c1_Wf0'] = p['c1_Wf0'] * sB
    w['c1_Wf1'] = p['c1_Wf1'] * sI
    w['c1_Wf2x'] = jnp.concatenate(
        [p['c1_Wf2a'], p['c1_Wf2b'], p['c1_Wf2b'], p['c1_Wf2b']], axis=1) * sI
    big = jnp.zeros((4 * NUM_FEATURES, NUM_FEATURES + 3 * MUL), jnp.float32)
    big = big.at[0:16, 0:16].set(p['c1_Wl2s'] * s16)
    big = big.at[16:32, 16:24].set(p['c1_Wl2v'] * s16)
    big = big.at[32:48, 24:32].set(p['c1_Wl2v'] * s16)
    big = big.at[48:64, 32:40].set(p['c1_Wl2v'] * s16)
    w['c1_W1big'] = big
    w['c2_Wf0'] = p['c2_Wf0'] * sB
    w['c2_Wf1'] = p['c2_Wf1'] * sI
    wb = p['c2_Wf2b'] * s3
    w['c2_Wf2x'] = jnp.concatenate([p['c2_Wf2a'], wb, wb, wb], axis=1) * sI
    R = jnp.zeros((4 * MUL, 2 * MUL), jnp.float32)
    R = R.at[0:8, 0:8].set(eye8)
    R = R.at[8:16, 8:16].set(eye8)
    R = R.at[16:24, 8:16].set(eye8)
    R = R.at[24:32, 8:16].set(eye8)
    w['c2_R'] = R

    pieces = []
    for name, (r, c) in _SLAB_LAYOUT:
        wm = w[name].astype(jnp.float32)
        assert wm.shape == (r, c), (name, wm.shape, (r, c))
        buf = jnp.zeros((_round_up(r, 8), _SLAB_COLS), jnp.float32)
        buf = buf.at[:r, :c].set(wm)
        pieces.append(buf)
    return jnp.concatenate(pieces, axis=0)          # [_SLAB_ROWS, _SLAB_COLS]


# --------------------------------- forward -------------------------------------
@jax.jit
def hdnnp_forward(slab, atomic_numbers, edge_src, edge_dst, edge_vec):
    n = atomic_numbers.shape[0]
    e = edge_src.shape[0]
    n_pad = _round_up(max(n, 8), 8)
    te = min(EDGE_TILE, _round_up(max(e, 8), 8))
    n_tiles = max(1, -(-e // te))
    e_pad = te * n_tiles

    onehot = jax.nn.one_hot(atomic_numbers, NUM_TYPES, dtype=jnp.float32)
    onehot = jnp.pad(onehot, ((0, n_pad - n), (0, 0)))
    vec = jnp.pad(edge_vec.astype(jnp.float32), ((0, e_pad - e), (0, 0)))
    src = jnp.pad(edge_src.astype(jnp.int32), (0, e_pad - e))
    dst = jnp.pad(edge_dst.astype(jnp.int32), (0, e_pad - e))

    kernel = _make_kernel(n_pad, te, n_tiles, e)

    vmem_bytes = 4 * (n_pad * (3 * NUM_FEATURES + 32 + 40 + 128)
                      + 2 * te * (32 + 40 + 128)
                      + _SLAB_ROWS * 128) + (8 << 20)
    vmem_limit = int(min(max(vmem_bytes, 32 << 20), 64 << 20))

    out = pl.pallas_call(
        kernel,
        out_shape=jax.ShapeDtypeStruct((1, n_pad), jnp.float32),
        grid_spec=pltpu.PrefetchScalarGridSpec(
            num_scalar_prefetch=2,                     # edge_src, edge_dst in SMEM
            grid=(2, n_tiles),                         # (conv phase, edge tile)
            in_specs=[
                pl.BlockSpec((n_pad, NUM_TYPES), lambda p, t, *_: (0, 0)),
                pl.BlockSpec((te, 3), lambda p, t, *_: (t, 0)),
                pl.BlockSpec((_SLAB_ROWS, _SLAB_COLS), lambda p, t, *_: (0, 0)),
            ],
            out_specs=pl.BlockSpec((1, n_pad), lambda p, t, *_: (0, 0)),
            scratch_shapes=[
                pltpu.VMEM((n_pad, NUM_FEATURES), jnp.float32),   # emb_s
                pltpu.VMEM((n_pad, NUM_FEATURES), jnp.float32),   # sc1_s
                pltpu.VMEM((n_pad, NUM_FEATURES), jnp.float32),   # sc2_s
                pltpu.VMEM((n_pad, 32), jnp.float32),             # gtab (gather table)
                pltpu.VMEM((n_pad, NUM_FEATURES + 3 * MUL), jnp.float32),  # acc
                pltpu.VMEM((te, 32), jnp.float32),                # gbuf
                pltpu.VMEM((te, NUM_FEATURES + 3 * MUL), jnp.float32),     # efbuf
            ],
        ),
        compiler_params=pltpu.CompilerParams(
            dimension_semantics=("arbitrary", "arbitrary"),
            vmem_limit_bytes=vmem_limit,
        ),
    )(src, dst, onehot, vec, slab)

    return out[0, :n][:, None]                         # per-atom energy [N,1]


if __name__ == "__main__":
    key = jax.random.PRNGKey(0)
    kp, k1, k2, k3, k4 = jax.random.split(key, 5)
    params = init_params(kp)
    slab = prepare_params(params)

    N, E = 8, 16
    atomic_numbers = jax.random.randint(k1, (N,), 0, NUM_TYPES)
    edge_src = jax.random.randint(k2, (E,), 0, N)
    edge_dst = jax.random.randint(k3, (E,), 0, N)
    edge_vec = jax.random.normal(k4, (E, 3), jnp.float32) * 1.5

    out = hdnnp_forward(slab, atomic_numbers, edge_src, edge_dst, edge_vec)
    out = jax.block_until_ready(out)
    assert out.shape == (N, 1)
    assert bool(jnp.all(jnp.isfinite(out)))
    print("KERNEL_OK")
</pallas_src>

<mosaic_0001>
module attributes {stable_mosaic.version = 11 : i64} {
  func.func @kernel(%arg0: i32, %arg1: i32, %arg2: memref<16xi32, #tpu.memory_space<smem>>, %arg3: memref<16xi32, #tpu.memory_space<smem>>, %arg4: memref<8x4xf32, #tpu.memory_space<vmem>>, %arg5: memref<16x3xf32, #tpu.memory_space<vmem>>, %arg6: memref<296x64xf32, #tpu.memory_space<vmem>>, %arg7: memref<1x8xf32, #tpu.memory_space<vmem>>, %arg8: memref<8x16xf32, #tpu.memory_space<vmem>>, %arg9: memref<8x16xf32, #tpu.memory_space<vmem>>, %arg10: memref<8x16xf32, #tpu.memory_space<vmem>>, %arg11: memref<8x32xf32, #tpu.memory_space<vmem>>, %arg12: memref<8x40xf32, #tpu.memory_space<vmem>>, %arg13: memref<16x32xf32, #tpu.memory_space<vmem>>, %arg14: memref<16x40xf32, #tpu.memory_space<vmem>>) attributes {dimension_semantics = [#tpu.dimension_semantics<arbitrary>, #tpu.dimension_semantics<arbitrary>], iteration_bounds = array<i64: 2, 1>, scalar_prefetch = 2 : i64, scratch_operands = 7 : i64, tpu.core_type = #tpu.core_type<tc>, window_params = [{pipeline_mode = #tpu.pipeline_mode<synchronous>, transform_indices = @transform_0, window_bounds = array<i64: 8, 4>}, {transform_indices = @transform_1, window_bounds = array<i64: 16, 3>}, {pipeline_mode = #tpu.pipeline_mode<synchronous>, transform_indices = @transform_2, window_bounds = array<i64: 296, 64>}, {pipeline_mode = #tpu.pipeline_mode<synchronous>, transform_indices = @transform_3, window_bounds = array<i64: 1, 8>}]} {
    %c0_i32 = arith.constant 0 : i32
    %0 = arith.cmpi eq, %arg0, %c0_i32 : i32
    %c0_i32_0 = arith.constant 0 : i32
    %1 = arith.cmpi eq, %arg1, %c0_i32_0 : i32
    %2 = arith.andi %0, %1 : i1
    %3 = arith.extui %2 : i1 to i32
    %c0_i32_1 = arith.constant 0 : i32
    %4 = arith.cmpi ne, %3, %c0_i32_1 : i32
    scf.if %4 {
      %c0_33 = arith.constant 0 : index
      %c0_34 = arith.constant 0 : index
      %84 = vector.load %arg4[%c0_33, %c0_34] : memref<8x4xf32, #tpu.memory_space<vmem>>, vector<8x4xf32>
      %c0_35 = arith.constant 0 : index
      %c0_36 = arith.constant 0 : index
      %85 = vector.load %arg6[%c0_35, %c0_36] : memref<296x64xf32, #tpu.memory_space<vmem>>, vector<4x16xf32>
      %cst_37 = arith.constant dense<0.000000e+00> : vector<8x16xf32>
      %86 = tpu.matmul %84, %85, %cst_37 {dimension_numbers = #tpu.dot_dimension_numbers<[1], [0], [0], [1], [0, 0, 1, 1], [], []>} : vector<8x4xf32>, vector<4x16xf32>, vector<8x16xf32> -> vector<8x16xf32>
      %c0_38 = arith.constant 0 : index
      %c0_39 = arith.constant 0 : index
      %87 = vector.load %arg8[%c0_38, %c0_39] : memref<8x16xf32, #tpu.memory_space<vmem>>, vector<8x16xf32>
      tpu.vector_store %arg8[%c0_38, %c0_39], %86 {strides = array<i32>} : memref<8x16xf32, #tpu.memory_space<vmem>>, vector<8x16xf32>,
      %c8 = arith.constant 8 : index
      %c0_40 = arith.constant 0 : index
      %88 = vector.load %arg6[%c8, %c0_40] : memref<296x64xf32, #tpu.memory_space<vmem>>, vector<16x32xf32>
      %cst_41 = arith.constant dense<0.000000e+00> : vector<8x32xf32>
      %89 = tpu.matmul %86, %88, %cst_41 {dimension_numbers = #tpu.dot_dimension_numbers<[1], [0], [0], [1], [0, 0, 1, 1], [], []>} : vector<8x16xf32>, vector<16x32xf32>, vector<8x32xf32> -> vector<8x32xf32>
      %90 = vector.extract_strided_slice %89 {offsets = [0, 0], sizes = [8, 16], strides = [1, 1]} : vector<8x32xf32> to vector<8x16xf32>
      %c0_42 = arith.constant 0 : index
      %c0_43 = arith.constant 0 : index
      %91 = vector.load %arg9[%c0_42, %c0_43] : memref<8x16xf32, #tpu.memory_space<vmem>>, vector<8x16xf32>
      tpu.vector_store %arg9[%c0_42, %c0_43], %90 {strides = array<i32>} : memref<8x16xf32, #tpu.memory_space<vmem>>, vector<8x16xf32>,
      %92 = vector.extract_strided_slice %89 {offsets = [0, 16], sizes = [8, 16], strides = [1, 1]} : vector<8x32xf32> to vector<8x16xf32>
      %cst_44 = arith.constant 0.000000e+00 : f32
      %93 = vector.broadcast %cst_44 : f32 to vector<8x16xf32>
      %94 = tpu.concatenate %92, %93 in 1 : vector<8x16xf32>, vector<8x16xf32> -> vector<8x32xf32>
      %c0_45 = arith.constant 0 : index
      %c0_46 = arith.constant 0 : index
      %95 = vector.load %arg11[%c0_45, %c0_46] : memref<8x32xf32, #tpu.memory_space<vmem>>, vector<8x32xf32>
      tpu.vector_store %arg11[%c0_45, %c0_46], %94 {strides = array<i32>} : memref<8x32xf32, #tpu.memory_space<vmem>>, vector<8x32xf32>,
      %cst_47 = arith.constant 0.000000e+00 : f32
      %96 = vector.broadcast %cst_47 : f32 to vector<8x40xf32>
      %c0_48 = arith.constant 0 : index
      %c0_49 = arith.constant 0 : index
      %97 = vector.load %arg12[%c0_48, %c0_49] : memref<8x40xf32, #tpu.memory_space<vmem>>, vector<8x40xf32>
      tpu.vector_store %arg12[%c0_48, %c0_49], %96 {strides = array<i32>} : memref<8x40xf32, #tpu.memory_space<vmem>>, vector<8x40xf32>,
    } else {
    }
    %c1_i32 = arith.constant 1 : i32
    %5 = arith.cmpi eq, %arg0, %c1_i32 : i32
    %c0_i32_2 = arith.constant 0 : i32
    %6 = arith.cmpi eq, %arg1, %c0_i32_2 : i32
    %7 = arith.andi %5, %6 : i1
    %8 = arith.extui %7 : i1 to i32
    %c0_i32_3 = arith.constant 0 : i32
    %9 = arith.cmpi ne, %8, %c0_i32_3 : i32
    scf.if %9 {
      %c0_33 = arith.constant 0 : index
      %c0_34 = arith.constant 0 : index
      %84 = vector.load %arg12[%c0_33, %c0_34] : memref<8x40xf32, #tpu.memory_space<vmem>>, vector<8x40xf32>
      %85 = vector.extract_strided_slice %84 {offsets = [0, 0], sizes = [8, 16], strides = [1, 1]} : vector<8x40xf32> to vector<8x16xf32>
      %c0_35 = arith.constant 0 : index
      %c0_36 = arith.constant 0 : index
      %86 = vector.load %arg9[%c0_35, %c0_36] : memref<8x16xf32, #tpu.memory_space<vmem>>, vector<8x16xf32>
      %87 = arith.addf %85, %86 : vector<8x16xf32>
      %88 = vector.extract_strided_slice %84 {offsets = [0, 16], sizes = [8, 24], strides = [1, 1]} : vector<8x40xf32> to vector<8x24xf32>
      %89 = arith.mulf %87, %87 : vector<8x16xf32>
      %cst_37 = arith.constant dense<0.000000e+00> : vector<8xf32>
      %90 = vector.multi_reduction <add>, %89, %cst_37 [1] : vector<8x16xf32> to vector<8xf32>
      %91 = vector.shape_cast %90 : vector<8xf32> to vector<8x1xf32>
      %cst_38 = arith.constant 1.600000e+01 : f32
      %92 = vector.broadcast %cst_38 : f32 to vector<8x1xf32>
      %93 = arith.divf %91, %92 : vector<8x1xf32>
      %cst_39 = arith.constant 9.99999974E-6 : f32
      %94 = vector.broadcast %cst_39 : f32 to vector<8x1xf32>
      %95 = arith.addf %93, %94 : vector<8x1xf32>
      %96 = math.rsqrt %95 : vector<8x1xf32>
      %97 = arith.mulf %88, %88 : vector<8x24xf32>
      %cst_40 = arith.constant dense<0.000000e+00> : vector<8xf32>
      %98 = vector.multi_reduction <add>, %97, %cst_40 [1] : vector<8x24xf32> to vector<8xf32>
      %99 = vector.shape_cast %98 : vector<8xf32> to vector<8x1xf32>
      %cst_41 = arith.constant 2.400000e+01 : f32
      %100 = vector.broadcast %cst_41 : f32 to vector<8x1xf32>
      %101 = arith.divf %99, %100 : vector<8x1xf32>
      %cst_42 = arith.constant 9.99999974E-6 : f32
      %102 = vector.broadcast %cst_42 : f32 to vector<8x1xf32>
      %103 = arith.addf %101, %102 : vector<8x1xf32>
      %104 = math.rsqrt %103 : vector<8x1xf32>
      %105 = vector.broadcast %96 : vector<8x1xf32> to vector<8x16xf32>
      %106 = arith.mulf %87, %105 : vector<8x16xf32>
      %c88 = arith.constant 88 : index
      %c0_43 = arith.constant 0 : index
      %107 = vector.load %arg6[%c88, %c0_43] : memref<296x64xf32, #tpu.memory_space<vmem>>, vector<1x16xf32>
      %108 = vector.broadcast %107 : vector<1x16xf32> to vector<8x16xf32>
      %109 = arith.mulf %106, %108 : vector<8x16xf32>
      %110 = vector.broadcast %104 : vector<8x1xf32> to vector<8x24xf32>
      %111 = arith.mulf %88, %110 : vector<8x24xf32>
      %c96 = arith.constant 96 : index
      %c0_44 = arith.constant 0 : index
      %112 = vector.load %arg6[%c96, %c0_44] : memref<296x64xf32, #tpu.memory_space<vmem>>, vector<1x24xf32>
      %113 = vector.broadcast %112 : vector<1x24xf32> to vector<8x24xf32>
      %114 = arith.mulf %111, %113 : vector<8x24xf32>
      %115 = vector.extract_strided_slice %109 {offsets = [0, 0], sizes = [8, 8], strides = [1, 1]} : vector<8x16xf32> to vector<8x8xf32>
      %116 = arith.negf %115 : vector<8x8xf32>
      %117 = math.exp %116 : vector<8x8xf32>
      %cst_45 = arith.constant 1.000000e+00 : f32
      %118 = vector.broadcast %cst_45 : f32 to vector<8x8xf32>
      %119 = arith.addf %118, %117 : vector<8x8xf32>
      %120 = arith.divf %118, %119 : vector<8x8xf32>
      %121 = arith.mulf %115, %120 : vector<8x8xf32>
      %122 = vector.extract_strided_slice %109 {offsets = [0, 8], sizes = [8, 8], strides = [1, 1]} : vector<8x16xf32> to vector<8x8xf32>
      %123 = arith.negf %122 : vector<8x8xf32>
      %124 = math.exp %123 : vector<8x8xf32>
      %cst_46 = arith.constant 1.000000e+00 : f32
      %125 = vector.broadcast %cst_46 : f32 to vector<8x8xf32>
      %126 = arith.addf %125, %124 : vector<8x8xf32>
      %127 = arith.divf %125, %126 : vector<8x8xf32>
      %128 = arith.mulf %122, %127 : vector<8x8xf32>
      %129 = tpu.concatenate %128, %128, %128 in 1 : vector<8x8xf32>, vector<8x8xf32>, vector<8x8xf32> -> vector<8x24xf32>
      %130 = arith.mulf %114, %129 : vector<8x24xf32>
      %c24 = arith.constant 24 : index
      %c0_47 = arith.constant 0 : index
      %131 = vector.load %arg6[%c24, %c0_47] : memref<296x64xf32, #tpu.memory_space<vmem>>, vector<8x24xf32>
      %cst_48 = arith.constant dense<0.000000e+00> : vector<8x24xf32>
      %132 = tpu.matmul %121, %131, %cst_48 {dimension_numbers = #tpu.dot_dimension_numbers<[1], [0], [0], [1], [0, 0, 1, 1], [], []>} : vector<8x8xf32>, vector<8x24xf32>, vector<8x24xf32> -> vector<8x24xf32>
      %133 = vector.extract_strided_slice %132 {offsets = [0, 0], sizes = [8, 16], strides = [1, 1]} : vector<8x24xf32> to vector<8x16xf32>
      %c0_49 = arith.constant 0 : index
      %c0_50 = arith.constant 0 : index
      %134 = vector.load %arg10[%c0_49, %c0_50] : memref<8x16xf32, #tpu.memory_space<vmem>>, vector<8x16xf32>
      tpu.vector_store %arg10[%c0_49, %c0_50], %133 {strides = array<i32>} : memref<8x16xf32, #tpu.memory_space<vmem>>, vector<8x16xf32>,
      %c32 = arith.constant 32 : index
      %c0_51 = arith.constant 0 : index
      %135 = vector.load %arg6[%c32, %c0_51] : memref<296x64xf32, #tpu.memory_space<vmem>>, vector<24x24xf32>
      %cst_52 = arith.constant dense<0.000000e+00> : vector<8x24xf32>
      %136 = tpu.matmul %130, %135, %cst_52 {dimension_numbers = #tpu.dot_dimension_numbers<[1], [0], [0], [1], [0, 0, 1, 1], [], []>} : vector<8x24xf32>, vector<24x24xf32>, vector<8x24xf32> -> vector<8x24xf32>
      %137 = vector.extract_strided_slice %132 {offsets = [0, 16], sizes = [8, 8], strides = [1, 1]} : vector<8x24xf32> to vector<8x8xf32>
      %138 = tpu.concatenate %137, %136 in 1 : vector<8x8xf32>, vector<8x24xf32> -> vector<8x32xf32>
      %c0_53 = arith.constant 0 : index
      %c0_54 = arith.constant 0 : index
      %139 = vector.load %arg11[%c0_53, %c0_54] : memref<8x32xf32, #tpu.memory_space<vmem>>, vector<8x32xf32>
      tpu.vector_store %arg11[%c0_53, %c0_54], %138 {strides = array<i32>} : memref<8x32xf32, #tpu.memory_space<vmem>>, vector<8x32xf32>,
      %cst_55 = arith.constant 0.000000e+00 : f32
      %140 = vector.broadcast %cst_55 : f32 to vector<8x40xf32>
      %c0_56 = arith.constant 0 : index
      %c0_57 = arith.constant 0 : index
      %141 = vector.load %arg12[%c0_56, %c0_57] : memref<8x40xf32, #tpu.memory_space<vmem>>, vector<8x40xf32>
      tpu.vector_store %arg12[%c0_56, %c0_57], %140 {strides = array<i32>} : memref<8x40xf32, #tpu.memory_space<vmem>>, vector<8x40xf32>,
    } else {
    }
    %c16_i32 = arith.constant 16 : i32
    %10 = arith.muli %arg1, %c16_i32 : i32
    %c0 = arith.constant 0 : index
    %c0_4 = arith.constant 0 : index
    %11 = vector.load %arg5[%c0, %c0_4] : memref<16x3xf32, #tpu.memory_space<vmem>>, vector<16x3xf32>
    %12 = arith.mulf %11, %11 : vector<16x3xf32>
    %cst = arith.constant dense<0.000000e+00> : vector<16xf32>
    %13 = vector.multi_reduction <add>, %12, %cst [1] : vector<16x3xf32> to vector<16xf32>
    %14 = vector.shape_cast %13 : vector<16xf32> to vector<16x1xf32>
    %cst_5 = arith.constant 9.99999996E-13 : f32
    %15 = vector.broadcast %cst_5 : f32 to vector<16x1xf32>
    %16 = arith.maximumf %14, %15 : vector<16x1xf32>
    %17 = math.rsqrt %16 : vector<16x1xf32>
    %18 = arith.mulf %16, %17 : vector<16x1xf32>
    %cst_6 = arith.constant 1.73205078 : f32
    %19 = vector.broadcast %cst_6 : f32 to vector<16x1xf32>
    %20 = arith.mulf %17, %19 : vector<16x1xf32>
    %21 = vector.extract_strided_slice %11 {offsets = [0, 1], sizes = [16, 1], strides = [1, 1]} : vector<16x3xf32> to vector<16x1xf32>
    %22 = arith.mulf %21, %20 : vector<16x1xf32>
    %23 = vector.extract_strided_slice %11 {offsets = [0, 2], sizes = [16, 1], strides = [1, 1]} : vector<16x3xf32> to vector<16x1xf32>
    %24 = arith.mulf %23, %20 : vector<16x1xf32>
    %25 = vector.extract_strided_slice %11 {offsets = [0, 0], sizes = [16, 1], strides = [1, 1]} : vector<16x3xf32> to vector<16x1xf32>
    %26 = arith.mulf %25, %20 : vector<16x1xf32>
    %27 = tpu.iota {dimensions = array<i32: 1>} : vector<1x8xi32>
    %28 = arith.sitofp %27 : vector<1x8xi32> to vector<1x8xf32>
    %cst_7 = arith.constant 1.000000e+00 : f32
    %29 = vector.broadcast %cst_7 : f32 to vector<1x8xf32>
    %30 = arith.addf %28, %29 : vector<1x8xf32>
    %cst_8 = arith.constant 0.52359879 : f32
    %31 = vector.broadcast %cst_8 : f32 to vector<1x8xf32>
    %32 = arith.mulf %30, %31 : vector<1x8xf32>
    %33 = vector.broadcast %18 : vector<16x1xf32> to vector<16x8xf32>
    %34 = vector.broadcast %32 : vector<1x8xf32> to vector<16x8xf32>
    %35 = arith.mulf %33, %34 : vector<16x8xf32>
    %36 = math.sin %35 : vector<16x8xf32>
    %cst_9 = arith.constant 0.333333343 : f32
    %37 = vector.broadcast %cst_9 : f32 to vector<16x1xf32>
    %38 = arith.mulf %37, %17 : vector<16x1xf32>
    %39 = vector.broadcast %38 : vector<16x1xf32> to vector<16x8xf32>
    %40 = arith.mulf %36, %39 : vector<16x8xf32>
    %cst_10 = arith.constant 0.166666672 : f32
    %41 = vector.broadcast %cst_10 : f32 to vector<16x1xf32>
    %42 = arith.mulf %18, %41 : vector<16x1xf32>
    %43 = arith.mulf %42, %42 : vector<16x1xf32>
    %44 = arith.mulf %43, %43 : vector<16x1xf32>
    %45 = arith.mulf %44, %43 : vector<16x1xf32>
    %cst_11 = arith.constant 2.800000e+01 : f32
    %46 = vector.broadcast %cst_11 : f32 to vector<16x1xf32>
    %47 = arith.mulf %46, %45 : vector<16x1xf32>
    %cst_12 = arith.constant 1.000000e+00 : f32
    %48 = vector.broadcast %cst_12 : f32 to vector<16x1xf32>
    %49 = arith.subf %48, %47 : vector<16x1xf32>
    %cst_13 = arith.constant 4.800000e+01 : f32
    %50 = vector.broadcast %cst_13 : f32 to vector<16x1xf32>
    %51 = arith.mulf %50, %45 : vector<16x1xf32>
    %52 = arith.mulf %51, %42 : vector<16x1xf32>
    %53 = arith.addf %49, %52 : vector<16x1xf32>
    %cst_14 = arith.constant 2.100000e+01 : f32
    %54 = vector.broadcast %cst_14 : f32 to vector<16x1xf32>
    %55 = arith.mulf %54, %45 : vector<16x1xf32>
    %56 = arith.mulf %55, %43 : vector<16x1xf32>
    %57 = arith.subf %53, %56 : vector<16x1xf32>
    %cst_15 = arith.constant 1.000000e+00 : f32
    %58 = vector.broadcast %cst_15 : f32 to vector<16x1xf32>
    %59 = arith.cmpf olt, %42, %58 : vector<16x1xf32>
    %cst_16 = arith.constant 0.000000e+00 : f32
    %60 = vector.broadcast %cst_16 : f32 to vector<16x1xf32>
    %61 = arith.select %59, %57, %60 : vector<16x1xi1>, vector<16x1xf32>
    %62 = vector.broadcast %61 : vector<16x1xf32> to vector<16x8xf32>
    %63 = arith.mulf %40, %62 : vector<16x8xf32>
    %64 = tpu.iota {dimensions = array<i32: 0>} : vector<16x1xi32>
    %65 = vector.broadcast %10 : i32 to vector<16x1xi32>
    %66 = arith.addi %64, %65 : vector<16x1xi32>
    %c16_i32_17 = arith.constant 16 : i32
    %67 = vector.broadcast %c16_i32_17 : i32 to vector<16x1xi32>
    %68 = arith.cmpi slt, %66, %67 : vector<16x1xi32>
    %69 = arith.extui %68 : vector<16x1xi1> to vector<16x1xi32>
    %70 = arith.sitofp %69 : vector<16x1xi32> to vector<16x1xf32>
    %c0_i32_18 = arith.constant 0 : i32
    %c16_i32_19 = arith.constant 16 : i32
    %71 = arith.addi %c0_i32_18, %c16_i32_19 : i32
    %c1_i32_20 = arith.constant 1 : i32
    scf.for %arg15 = %c0_i32_18 to %71 step %c1_i32_20  : i32 {
      %84 = arith.addi %10, %arg15 : i32
      %85 = arith.index_cast %84 : i32 to index
      %86 = memref.load %arg3[%85] : memref<16xi32, #tpu.memory_space<smem>>
      %87 = arith.index_cast %86 : i32 to index
      %c0_33 = arith.constant 0 : index
      %88 = vector.load %arg11[%87, %c0_33] : memref<8x32xf32, #tpu.memory_space<vmem>>, vector<1x32xf32>
      %89 = arith.index_cast %arg15 : i32 to index
      %c0_34 = arith.constant 0 : index
      %90 = vector.load %arg13[%89, %c0_34] : memref<16x32xf32, #tpu.memory_space<vmem>>, vector<1x32xf32>
      tpu.vector_store %arg13[%89, %c0_34], %88 {strides = array<i32>} : memref<16x32xf32, #tpu.memory_space<vmem>>, vector<1x32xf32>,
    }
    %c16_i32_21 = arith.constant 16 : i32
    %c0_i32_22 = arith.constant 0 : i32
    %72 = arith.cmpi eq, %arg0, %c0_i32_22 : i32
    %73 = arith.extui %72 : i1 to i32
    %c0_i32_23 = arith.constant 0 : i32
    %74 = arith.cmpi ne, %73, %c0_i32_23 : i32
    scf.if %74 {
      %c120 = arith.constant 120 : index
      %c0_33 = arith.constant 0 : index
      %84 = vector.load %arg6[%c120, %c0_33] : memref<296x64xf32, #tpu.memory_space<vmem>>, vector<8x16xf32>
      %cst_34 = arith.constant dense<0.000000e+00> : vector<16x16xf32>
      %85 = tpu.matmul %63, %84, %cst_34 {dimension_numbers = #tpu.dot_dimension_numbers<[1], [0], [0], [1], [0, 0, 1, 1], [], []>} : vector<16x8xf32>, vector<8x16xf32>, vector<16x16xf32> -> vector<16x16xf32>
      %86 = arith.negf %85 : vector<16x16xf32>
      %87 = math.exp %86 : vector<16x16xf32>
      %cst_35 = arith.constant 1.000000e+00 : f32
      %88 = vector.broadcast %cst_35 : f32 to vector<16x16xf32>
      %89 = arith.addf %88, %87 : vector<16x16xf32>
      %90 = arith.divf %88, %89 : vector<16x16xf32>
      %91 = arith.mulf %85, %90 : vector<16x16xf32>
      %c128 = arith.constant 128 : index
      %c0_36 = arith.constant 0 : index
      %92 = vector.load %arg6[%c128, %c0_36] : memref<296x64xf32, #tpu.memory_space<vmem>>, vector<16x16xf32>
      %cst_37 = arith.constant dense<0.000000e+00> : vector<16x16xf32>
      %93 = tpu.matmul %91, %92, %cst_37 {dimension_numbers = #tpu.dot_dimension_numbers<[1], [0], [0], [1], [0, 0, 1, 1], [], []>} : vector<16x16xf32>, vector<16x16xf32>, vector<16x16xf32> -> vector<16x16xf32>
      %94 = arith.negf %93 : vector<16x16xf32>
      %95 = math.exp %94 : vector<16x16xf32>
      %cst_38 = arith.constant 1.000000e+00 : f32
      %96 = vector.broadcast %cst_38 : f32 to vector<16x16xf32>
      %97 = arith.addf %96, %95 : vector<16x16xf32>
      %98 = arith.divf %96, %97 : vector<16x16xf32>
      %99 = arith.mulf %93, %98 : vector<16x16xf32>
      %c144 = arith.constant 144 : index
      %c0_39 = arith.constant 0 : index
      %100 = vector.load %arg6[%c144, %c0_39] : memref<296x64xf32, #tpu.memory_space<vmem>>, vector<16x64xf32>
      %cst_40 = arith.constant dense<0.000000e+00> : vector<16x64xf32>
      %101 = tpu.matmul %99, %100, %cst_40 {dimension_numbers = #tpu.dot_dimension_numbers<[1], [0], [0], [1], [0, 0, 1, 1], [], []>} : vector<16x16xf32>, vector<16x64xf32>, vector<16x64xf32> -> vector<16x64xf32>
      %c0_41 = arith.constant 0 : index
      %c0_42 = arith.constant 0 : index
      %102 = vector.load %arg13[%c0_41, %c0_42] : memref<16x32xf32, #tpu.memory_space<vmem>>, vector<16x16xf32>
      %103 = vector.broadcast %22 : vector<16x1xf32> to vector<16x16xf32>
      %104 = arith.mulf %102, %103 : vector<16x16xf32>
      %105 = vector.broadcast %24 : vector<16x1xf32> to vector<16x16xf32>
      %106 = arith.mulf %102, %105 : vector<16x16xf32>
      %107 = vector.broadcast %26 : vector<16x1xf32> to vector<16x16xf32>
      %108 = arith.mulf %102, %107 : vector<16x16xf32>
      %109 = tpu.concatenate %102, %104, %106, %108 in 1 : vector<16x16xf32>, vector<16x16xf32>, vector<16x16xf32>, vector<16x16xf32> -> vector<16x64xf32>
      %110 = arith.mulf %101, %109 : vector<16x64xf32>
      %c160 = arith.constant 160 : index
      %c0_43 = arith.constant 0 : index
      %111 = vector.load %arg6[%c160, %c0_43] : memref<296x64xf32, #tpu.memory_space<vmem>>, vector<64x40xf32>
      %cst_44 = arith.constant dense<0.000000e+00> : vector<16x40xf32>
      %112 = tpu.matmul %110, %111, %cst_44 {dimension_numbers = #tpu.dot_dimension_numbers<[1], [0], [0], [1], [0, 0, 1, 1], [], []>} : vector<16x64xf32>, vector<64x40xf32>, vector<16x40xf32> -> vector<16x40xf32>
      %113 = vector.broadcast %70 : vector<16x1xf32> to vector<16x40xf32>
      %114 = arith.mulf %112, %113 : vector<16x40xf32>
      %c0_45 = arith.constant 0 : index
      %c0_46 = arith.constant 0 : index
      %115 = vector.load %arg14[%c0_45, %c0_46] : memref<16x40xf32, #tpu.memory_space<vmem>>, vector<16x40xf32>
      tpu.vector_store %arg14[%c0_45, %c0_46], %114 {strides = array<i32>} : memref<16x40xf32, #tpu.memory_space<vmem>>, vector<16x40xf32>,
    } else {
    }
    %c1_i32_24 = arith.constant 1 : i32
    %75 = arith.cmpi eq, %arg0, %c1_i32_24 : i32
    %76 = arith.extui %75 : i1 to i32
    %c0_i32_25 = arith.constant 0 : i32
    %77 = arith.cmpi ne, %76, %c0_i32_25 : i32
    scf.if %77 {
      %c224 = arith.constant 224 : index
      %c0_33 = arith.constant 0 : index
      %84 = vector.load %arg6[%c224, %c0_33] : memref<296x64xf32, #tpu.memory_space<vmem>>, vector<8x16xf32>
      %cst_34 = arith.constant dense<0.000000e+00> : vector<16x16xf32>
      %85 = tpu.matmul %63, %84, %cst_34 {dimension_numbers = #tpu.dot_dimension_numbers<[1], [0], [0], [1], [0, 0, 1, 1], [], []>} : vector<16x8xf32>, vector<8x16xf32>, vector<16x16xf32> -> vector<16x16xf32>
      %86 = arith.negf %85 : vector<16x16xf32>
      %87 = math.exp %86 : vector<16x16xf32>
      %cst_35 = arith.constant 1.000000e+00 : f32
      %88 = vector.broadcast %cst_35 : f32 to vector<16x16xf32>
      %89 = arith.addf %88, %87 : vector<16x16xf32>
      %90 = arith.divf %88, %89 : vector<16x16xf32>
      %91 = arith.mulf %85, %90 : vector<16x16xf32>
      %c232 = arith.constant 232 : index
      %c0_36 = arith.constant 0 : index
      %92 = vector.load %arg6[%c232, %c0_36] : memref<296x64xf32, #tpu.memory_space<vmem>>, vector<16x16xf32>
      %cst_37 = arith.constant dense<0.000000e+00> : vector<16x16xf32>
      %93 = tpu.matmul %91, %92, %cst_37 {dimension_numbers = #tpu.dot_dimension_numbers<[1], [0], [0], [1], [0, 0, 1, 1], [], []>} : vector<16x16xf32>, vector<16x16xf32>, vector<16x16xf32> -> vector<16x16xf32>
      %94 = arith.negf %93 : vector<16x16xf32>
      %95 = math.exp %94 : vector<16x16xf32>
      %cst_38 = arith.constant 1.000000e+00 : f32
      %96 = vector.broadcast %cst_38 : f32 to vector<16x16xf32>
      %97 = arith.addf %96, %95 : vector<16x16xf32>
      %98 = arith.divf %96, %97 : vector<16x16xf32>
      %99 = arith.mulf %93, %98 : vector<16x16xf32>
      %c248 = arith.constant 248 : index
      %c0_39 = arith.constant 0 : index
      %100 = vector.load %arg6[%c248, %c0_39] : memref<296x64xf32, #tpu.memory_space<vmem>>, vector<16x32xf32>
      %cst_40 = arith.constant dense<0.000000e+00> : vector<16x32xf32>
      %101 = tpu.matmul %99, %100, %cst_40 {dimension_numbers = #tpu.dot_dimension_numbers<[1], [0], [0], [1], [0, 0, 1, 1], [], []>} : vector<16x16xf32>, vector<16x32xf32>, vector<16x32xf32> -> vector<16x32xf32>
      %c0_41 = arith.constant 0 : index
      %c0_42 = arith.constant 0 : index
      %102 = vector.load %arg13[%c0_41, %c0_42] : memref<16x32xf32, #tpu.memory_space<vmem>>, vector<16x32xf32>
      %cst_43 = arith.constant 1.000000e+00 : f32
      %103 = vector.broadcast %cst_43 : f32 to vector<16x8xf32>
      %104 = vector.broadcast %22 : vector<16x1xf32> to vector<16x8xf32>
      %105 = arith.mulf %104, %103 : vector<16x8xf32>
      %106 = vector.broadcast %24 : vector<16x1xf32> to vector<16x8xf32>
      %107 = arith.mulf %106, %103 : vector<16x8xf32>
      %108 = vector.broadcast %26 : vector<16x1xf32> to vector<16x8xf32>
      %109 = arith.mulf %108, %103 : vector<16x8xf32>
      %110 = tpu.concatenate %103, %105, %107, %109 in 1 : vector<16x8xf32>, vector<16x8xf32>, vector<16x8xf32>, vector<16x8xf32> -> vector<16x32xf32>
      %111 = arith.mulf %101, %102 : vector<16x32xf32>
      %112 = arith.mulf %111, %110 : vector<16x32xf32>
      %c264 = arith.constant 264 : index
      %c0_44 = arith.constant 0 : index
      %113 = vector.load %arg6[%c264, %c0_44] : memref<296x64xf32, #tpu.memory_space<vmem>>, vector<32x16xf32>
      %cst_45 = arith.constant dense<0.000000e+00> : vector<16x16xf32>
      %114 = tpu.matmul %112, %113, %cst_45 {dimension_numbers = #tpu.dot_dimension_numbers<[1], [0], [0], [1], [0, 0, 1, 1], [], []>} : vector<16x32xf32>, vector<32x16xf32>, vector<16x16xf32> -> vector<16x16xf32>
      %115 = vector.broadcast %70 : vector<16x1xf32> to vector<16x16xf32>
      %116 = arith.mulf %114, %115 : vector<16x16xf32>
      %cst_46 = arith.constant 0.000000e+00 : f32
      %117 = vector.broadcast %cst_46 : f32 to vector<16x24xf32>
      %118 = tpu.concatenate %116, %117 in 1 : vector<16x16xf32>, vector<16x24xf32> -> vector<16x40xf32>
      %c0_47 = arith.constant 0 : index
      %c0_48 = arith.constant 0 : index
      %119 = vector.load %arg14[%c0_47, %c0_48] : memref<16x40xf32, #tpu.memory_space<vmem>>, vector<16x40xf32>
      tpu.vector_store %arg14[%c0_47, %c0_48], %118 {strides = array<i32>} : memref<16x40xf32, #tpu.memory_space<vmem>>, vector<16x40xf32>,
    } else {
    }
    %c0_i32_26 = arith.constant 0 : i32
    %c16_i32_27 = arith.constant 16 : i32
    %78 = arith.addi %c0_i32_26, %c16_i32_27 : i32
    %c1_i32_28 = arith.constant 1 : i32
    scf.for %arg15 = %c0_i32_26 to %78 step %c1_i32_28  : i32 {
      %84 = arith.addi %10, %arg15 : i32
      %85 = arith.index_cast %84 : i32 to index
      %86 = memref.load %arg2[%85] : memref<16xi32, #tpu.memory_space<smem>>
      %87 = arith.index_cast %86 : i32 to index
      %c0_33 = arith.constant 0 : index
      %88 = vector.load %arg12[%87, %c0_33] : memref<8x40xf32, #tpu.memory_space<vmem>>, vector<1x40xf32>
      %89 = arith.index_cast %arg15 : i32 to index
      %c0_34 = arith.constant 0 : index
      %90 = vector.load %arg14[%89, %c0_34] : memref<16x40xf32, #tpu.memory_space<vmem>>, vector<1x40xf32>
      %91 = arith.addf %88, %90 : vector<1x40xf32>
      %92 = arith.index_cast %86 : i32 to index
      %c0_35 = arith.constant 0 : index
      %93 = vector.load %arg12[%92, %c0_35] : memref<8x40xf32, #tpu.memory_space<vmem>>, vector<1x40xf32>
      tpu.vector_store %arg12[%92, %c0_35], %91 {strides = array<i32>} : memref<8x40xf32, #tpu.memory_space<vmem>>, vector<1x40xf32>,
    }
    %c16_i32_29 = arith.constant 16 : i32
    %c1_i32_30 = arith.constant 1 : i32
    %79 = arith.cmpi eq, %arg0, %c1_i32_30 : i32
    %c0_i32_31 = arith.constant 0 : i32
    %80 = arith.cmpi eq, %arg1, %c0_i32_31 : i32
    %81 = arith.andi %79, %80 : i1
    %82 = arith.extui %81 : i1 to i32
    %c0_i32_32 = arith.constant 0 : i32
    %83 = arith.cmpi ne, %82, %c0_i32_32 : i32
    scf.if %83 {
      %c0_33 = arith.constant 0 : index
      %c0_34 = arith.constant 0 : index
      %84 = vector.load %arg12[%c0_33, %c0_34] : memref<8x40xf32, #tpu.memory_space<vmem>>, vector<8x16xf32>
      %c56 = arith.constant 56 : index
      %c0_35 = arith.constant 0 : index
      %85 = vector.load %arg6[%c56, %c0_35] : memref<296x64xf32, #tpu.memory_space<vmem>>, vector<16x16xf32>
      %cst_36 = arith.constant dense<0.000000e+00> : vector<8x16xf32>
      %86 = tpu.matmul %84, %85, %cst_36 {dimension_numbers = #tpu.dot_dimension_numbers<[1], [0], [0], [1], [0, 0, 1, 1], [], []>} : vector<8x16xf32>, vector<16x16xf32>, vector<8x16xf32> -> vector<8x16xf32>
      %c0_37 = arith.constant 0 : index
      %c0_38 = arith.constant 0 : index
      %87 = vector.load %arg10[%c0_37, %c0_38] : memref<8x16xf32, #tpu.memory_space<vmem>>, vector<8x16xf32>
      %88 = arith.addf %86, %87 : vector<8x16xf32>
      %89 = arith.mulf %88, %88 : vector<8x16xf32>
      %cst_39 = arith.constant dense<0.000000e+00> : vector<8xf32>
      %90 = vector.multi_reduction <add>, %89, %cst_39 [1] : vector<8x16xf32> to vector<8xf32>
      %91 = vector.shape_cast %90 : vector<8xf32> to vector<8x1xf32>
      %cst_40 = arith.constant 1.600000e+01 : f32
      %92 = vector.broadcast %cst_40 : f32 to vector<8x1xf32>
      %93 = arith.divf %91, %92 : vector<8x1xf32>
      %cst_41 = arith.constant 9.99999974E-6 : f32
      %94 = vector.broadcast %cst_41 : f32 to vector<8x1xf32>
      %95 = arith.addf %93, %94 : vector<8x1xf32>
      %96 = math.rsqrt %95 : vector<8x1xf32>
      %97 = vector.broadcast %96 : vector<8x1xf32> to vector<8x16xf32>
      %98 = arith.mulf %88, %97 : vector<8x16xf32>
      %c104 = arith.constant 104 : index
      %c0_42 = arith.constant 0 : index
      %99 = vector.load %arg6[%c104, %c0_42] : memref<296x64xf32, #tpu.memory_space<vmem>>, vector<1x16xf32>
      %100 = vector.broadcast %99 : vector<1x16xf32> to vector<8x16xf32>
      %101 = arith.mulf %98, %100 : vector<8x16xf32>
      %c0_43 = arith.constant 0 : index
      %c0_44 = arith.constant 0 : index
      %102 = vector.load %arg8[%c0_43, %c0_44] : memref<8x16xf32, #tpu.memory_space<vmem>>, vector<8x16xf32>
      %103 = arith.negf %101 : vector<8x16xf32>
      %104 = math.exp %103 : vector<8x16xf32>
      %cst_45 = arith.constant 1.000000e+00 : f32
      %105 = vector.broadcast %cst_45 : f32 to vector<8x16xf32>
      %106 = arith.addf %105, %104 : vector<8x16xf32>
      %107 = arith.divf %105, %106 : vector<8x16xf32>
      %108 = arith.mulf %101, %107 : vector<8x16xf32>
      %109 = arith.addf %102, %108 : vector<8x16xf32>
      %c72 = arith.constant 72 : index
      %c0_46 = arith.constant 0 : index
      %110 = vector.load %arg6[%c72, %c0_46] : memref<296x64xf32, #tpu.memory_space<vmem>>, vector<16x8xf32>
      %cst_47 = arith.constant dense<0.000000e+00> : vector<8x8xf32>
      %111 = tpu.matmul %109, %110, %cst_47 {dimension_numbers = #tpu.dot_dimension_numbers<[1], [0], [0], [1], [0, 0, 1, 1], [], []>} : vector<8x16xf32>, vector<16x8xf32>, vector<8x8xf32> -> vector<8x8xf32>
      %112 = arith.negf %111 : vector<8x8xf32>
      %113 = math.exp %112 : vector<8x8xf32>
      %cst_48 = arith.constant 1.000000e+00 : f32
      %114 = vector.broadcast %cst_48 : f32 to vector<8x8xf32>
      %115 = arith.addf %114, %113 : vector<8x8xf32>
      %116 = arith.divf %114, %115 : vector<8x8xf32>
      %117 = arith.mulf %111, %116 : vector<8x8xf32>
      %c112 = arith.constant 112 : index
      %c0_49 = arith.constant 0 : index
      %118 = vector.load %arg6[%c112, %c0_49] : memref<296x64xf32, #tpu.memory_space<vmem>>, vector<1x8xf32>
      %cst_50 = arith.constant dense<0.000000e+00> : vector<1x8xf32>
      %119 = tpu.matmul %118, %117, %cst_50 {dimension_numbers = #tpu.dot_dimension_numbers<[1], [1], [0], [0], [0, 0, 1, 0], [], []>} : vector<1x8xf32>, vector<8x8xf32>, vector<1x8xf32> -> vector<1x8xf32>
      %c0_51 = arith.constant 0 : index
      %c0_52 = arith.constant 0 : index
      %120 = vector.load %arg7[%c0_51, %c0_52] : memref<1x8xf32, #tpu.memory_space<vmem>>, vector<1x8xf32>
      tpu.vector_store %arg7[%c0_51, %c0_52], %119 {strides = array<i32>} : memref<1x8xf32, #tpu.memory_space<vmem>>, vector<1x8xf32>,
    } else {
    }
    return
  }
  func.func @transform_0(%arg0: i32, %arg1: i32, %arg2: memref<16xi32, #tpu.memory_space<smem>>, %arg3: memref<16xi32, #tpu.memory_space<smem>>) -> (i32, i32) {
    %c0_i32 = arith.constant 0 : i32
    %c0_i32_0 = arith.constant 0 : i32
    %c0_i32_1 = arith.constant 0 : i32
    return %c0_i32, %c0_i32_0 : i32, i32
  }
  func.func @transform_1(%arg0: i32, %arg1: i32, %arg2: memref<16xi32, #tpu.memory_space<smem>>, %arg3: memref<16xi32, #tpu.memory_space<smem>>) -> (i32, i32) {
    %c0_i32 = arith.constant 0 : i32
    %c0_i32_0 = arith.constant 0 : i32
    return %arg1, %c0_i32 : i32, i32
  }
  func.func @transform_2(%arg0: i32, %arg1: i32, %arg2: memref<16xi32, #tpu.memory_space<smem>>, %arg3: memref<16xi32, #tpu.memory_space<smem>>) -> (i32, i32) {
    %c0_i32 = arith.constant 0 : i32
    %c0_i32_0 = arith.constant 0 : i32
    %c0_i32_1 = arith.constant 0 : i32
    return %c0_i32, %c0_i32_0 : i32, i32
  }
  func.func @transform_3(%arg0: i32, %arg1: i32, %arg2: memref<16xi32, #tpu.memory_space<smem>>, %arg3: memref<16xi32, #tpu.memory_space<smem>>) -> (i32, i32) {
    %c0_i32 = arith.constant 0 : i32
    %c0_i32_0 = arith.constant 0 : i32
    %c0_i32_1 = arith.constant 0 : i32
    return %c0_i32, %c0_i32_0 : i32, i32
  }
}

</mosaic_0001>

<llo_original>
// kernel: hdnnp_forward.1
$region0: #{hdnnp_forward.1}
  #allocation0 [shape = 'u32[]', space=smem, size = 0x4, offset = 0x4, fixed_abs, tag = 'smem constant byte address 0x4 - core index']
  #allocation1 [shape = 'u32[144,128]{1,0:T(1,128)}', space=vmem, size = 0x12000, scoped, tag = 'internal scratch']
  #allocation2 [shape = 'f32[8,16]{1,0:T(8,128)}', space=vmem, size = 0x1000, scoped, tag = 'scratch operand']
  #allocation3 [shape = 'f32[8,16]{1,0:T(8,128)}', space=vmem, size = 0x1000, scoped, tag = 'scratch operand']
  #allocation4 [shape = 'f32[8,16]{1,0:T(8,128)}', space=vmem, size = 0x1000, scoped, tag = 'scratch operand']
  #allocation5 [shape = 'f32[8,32]{1,0:T(8,128)}', space=vmem, size = 0x1000, scoped, tag = 'scratch operand']
  #allocation6 [shape = 'f32[8,40]{1,0:T(8,128)}', space=vmem, size = 0x1000, scoped, tag = 'scratch operand']
  #allocation7 [shape = 'f32[16,32]{1,0:T(8,128)}', space=vmem, size = 0x2000, scoped, tag = 'scratch operand']
  #allocation8 [shape = 'f32[16,40]{1,0:T(8,128)}', space=vmem, size = 0x2000, scoped, tag = 'scratch operand']
  #allocation9 [shape = 's32[1]{0}', space=sflag, size = 0x4, scoped, tag = 'scoped memory for hdnnp_forward.1']
  #allocation10 [shape = 'u8[512]{0}', space=smem, size = 0x200, scoped, tag = 'prefetched SMEM operand 0']
  #allocation11 [shape = 'u8[512]{0}', space=smem, size = 0x200, scoped, tag = 'prefetched SMEM operand 1']
  %s0 = inlined_call_operand.vmem [shape: s32[16], index: 0, kind: input, shape index: {}]
  %s1 = inlined_call_operand.vmem [shape: s32[16], index: 1, kind: input, shape index: {}]
  %s2 = inlined_call_operand.vmem [shape: f32[8,4], index: 2, kind: input, shape index: {}]
  %s3 = inlined_call_operand.vmem [shape: f32[16,3], index: 3, kind: input, shape index: {}]
  %s4 = inlined_call_operand.vmem [shape: f32[296,64], index: 4, kind: input, shape index: {}]
  %s5 = inlined_call_operand.hbm [shape: f32[1,8], index: 5, kind: output, shape index: {}]
  %s6 = sld [smem:[#allocation0]]
  $region79: #{hdnnp_forward.1} parent=0
    _
  %s8 = ssub.s32 1, %s6
  %s9 = scalar_select 0, %s8, %s6
  %s10 = sshll.u32 %s0, 4
  %s11 = int_to_ptr.vmem [resolvable:$true] %s10
  %13 = dma.vmem_to_smem %s11, 16, [#allocation10], [#allocation9]
  %s14 = sshll.u32 %s1, 4
  %s15 = int_to_ptr.vmem [resolvable:$true] %s14
  %17 = dma.vmem_to_smem %s15, 16, [#allocation11], [#allocation9]
  %18 = dma.done [#allocation9], 32
  %19 = sfence
  $region1: #{hdnnp_forward.1} parent=0
    #allocation12 [shape = 'u8[512]{0}', space=vmem, size = 0x400, scoped, tag = 'output window, operand 0, single buffered']
    #allocation13 [shape = 's32[2]{0}', space=sflag, size = 0x8, scoped, tag = 'scoped memory for hdnnp_forward.1']
    %20 = vsyncpa [#allocation13], 0
    loop: start=0, step=1, limit=4
    $region2: #{hdnnp_forward.1} parent=1 // loop_pre_header
      _
    $region3: #{hdnnp_forward.1} parent=1 // loop_header
      %s22 = sphi 0, %s26
      %p23 = scmp.ge.s32.totalorder %s22, 4
      %s29 = sphi 0, %s41
      %s30 = sphi 0, %s37
      %s31 = sphi 0, %s29
      %s32 = sphi 0, %s30
      %s33 = sphi 0, %s31
      %s34 = sphi 0, %s32
      %s42 = sphi 0, %s42
      %s44 = sphi 0, %s42
      %s45 = sphi 0, %s44
      %s59 = sphi 0, %s45
      %s65 = sphi 0, %s67
      %s68 = sphi 0, %s65
      %s69 = sphi 0, %s68
      %s85 = sphi 0, %s69
      %s89 = sphi 0, %s89
      %s91 = sphi 0, %s89
      %s92 = sphi 0, %s91
      %s106 = sphi 0, %s92
      %s110 = sphi 0, %s110
      %s112 = sphi 0, %s110
      %s113 = sphi 0, %s112
      %s127 = sphi 0, %s113
    $region4: #{hdnnp_forward.1} parent=1 // loop_header_branch
      %25 = sbr.rel (%p23) target = $region8
    $region5: #{hdnnp_forward.1} parent=1 // loop_body
      %s27 = ssub.s32 %s22, 1
      %s28 = ssub.s32 %s22, 2
      %s35 = sadd.s32 1, %s30
      %p36 = scmp.ge.s32.totalorder %s35, 1
      %s37 = scalar_select %p36, 0, %s35
      %s38 = sadd.s32 1, %s29
      %s39 = scalar_select %p36, %s38, %s29
      %p40 = scmp.ge.s32.totalorder %s39, 2
      %s41 = scalar_select %p40, 0, %s39
      %s43 = sadd.s32 %s42, 1
      %p46 = scmp.eq.s32.totalorder %s22, 1
      %p47 = scmp.ne.s32.totalorder %s42, %s44
      %p48 = scmp.eq.s32.totalorder %s22, 0
      %p49 = por %p47, %p48
      %p50 = scmp.ne.s32.totalorder %s42, %s44
      %p51 = scmp.eq.s32.totalorder %s27, 1
      %p52 = por %p50, %p51
      %p53 = scmp.ne.s32.totalorder %s44, %s45
      %p54 = scmp.eq.s32.totalorder %s27, 0
      %p55 = por %p53, %p54
      %p56 = scmp.ne.s32.totalorder %s44, %s45
      %p57 = scmp.eq.s32.totalorder %s28, 1
      %p58 = por %p56, %p57
      %p60 = scmp.ne.s32.totalorder %s45, %s59
      %p61 = scmp.eq.s32.totalorder %s28, 0
      %p62 = por %p60, %p61
      %s63 = ssub.s32 %s30, %s37
      %p64 = scmp.eq.s32.totalorder %s63, 0
      %s66 = sadd.s32 %s65, 1
      %s67 = scalar_select %p64, %s65, %s66
      %p70 = pneg %p64
      %p71 = scmp.eq.s32.totalorder %s22, 1
      %p72 = por %p70, %p71
      %p73 = scmp.ne.s32.totalorder %s65, %s68
      %p74 = scmp.eq.s32.totalorder %s22, 0
      %p75 = por %p73, %p74
      %p76 = scmp.ne.s32.totalorder %s65, %s68
      %p77 = scmp.eq.s32.totalorder %s27, 1
      %p78 = por %p76, %p77
      %p79 = scmp.ne.s32.totalorder %s68, %s69
      %p80 = scmp.eq.s32.totalorder %s27, 0
      %p81 = por %p79, %p80
      %p82 = scmp.ne.s32.totalorder %s68, %s69
      %p83 = scmp.eq.s32.totalorder %s28, 1
      %p84 = por %p82, %p83
      %p86 = scmp.ne.s32.totalorder %s69, %s85
      %p87 = scmp.eq.s32.totalorder %s28, 0
      %p88 = por %p86, %p87
      %s90 = sadd.s32 %s89, 1
      %p93 = scmp.eq.s32.totalorder %s22, 1
      %p94 = scmp.ne.s32.totalorder %s89, %s91
      %p95 = scmp.eq.s32.totalorder %s22, 0
      %p96 = por %p94, %p95
      %p97 = scmp.ne.s32.totalorder %s89, %s91
      %p98 = scmp.eq.s32.totalorder %s27, 1
      %p99 = por %p97, %p98
      %p100 = scmp.ne.s32.totalorder %s91, %s92
      %p101 = scmp.eq.s32.totalorder %s27, 0
      %p102 = por %p100, %p101
      %p103 = scmp.ne.s32.totalorder %s91, %s92
      %p104 = scmp.eq.s32.totalorder %s28, 1
      %p105 = por %p103, %p104
      %p107 = scmp.ne.s32.totalorder %s92, %s106
      %p108 = scmp.eq.s32.totalorder %s28, 0
      %p109 = por %p107, %p108
      %s111 = sadd.s32 %s110, 1
      %p114 = scmp.eq.s32.totalorder %s22, 1
      %p115 = scmp.ne.s32.totalorder %s110, %s112
      %p116 = scmp.eq.s32.totalorder %s22, 0
      %p117 = por %p115, %p116
      %p118 = scmp.ne.s32.totalorder %s110, %s112
      %p119 = scmp.eq.s32.totalorder %s27, 1
      %p120 = por %p118, %p119
      %p121 = scmp.ne.s32.totalorder %s112, %s113
      %p122 = scmp.eq.s32.totalorder %s27, 0
      %p123 = por %p121, %p122
      %p124 = scmp.ne.s32.totalorder %s112, %s113
      %p125 = scmp.eq.s32.totalorder %s28, 1
      %p126 = por %p124, %p125
      %p128 = scmp.ne.s32.totalorder %s113, %s127
      %p129 = scmp.eq.s32.totalorder %s28, 0
      %p130 = por %p128, %p129
      %p131 = scmp.le.s32.totalorder 1, %s22
      %p132 = scmp.lt.s32.totalorder %s22, 3
      %p133 = pnand %p131, %p132
      %p134 = pneg %p133
      // Predicated region
      $region9: #{hdnnp_forward.1} parent=5 // pred_check
        _
      $region10: #{hdnnp_forward.1} parent=5 // pred_check_branch
        %136 = sbr.rel (%p133) target = $region12
      $region11: #{hdnnp_forward.1} parent=5 // pred_region
        %s137 = ssub.s32 %s22, 1
        // Predicated region
        $region13: #{hdnnp_forward.1} parent=11 // pred_check
          %p138 = pneg %p55
        $region14: #{hdnnp_forward.1} parent=11 // pred_check_branch
          %140 = sbr.rel (%p138) target = $region16
        $region15: #{hdnnp_forward.1} parent=11 // pred_region
          _
        $region16: #{hdnnp_forward.1} parent=11 // pred_fallthru
          _
        // Predicated region
        $region17: #{hdnnp_forward.1} parent=11 // pred_check
          %p141 = pneg %p81
        $region18: #{hdnnp_forward.1} parent=11 // pred_check_branch
          %143 = sbr.rel (%p141) target = $region20
        $region19: #{hdnnp_forward.1} parent=11 // pred_region
          %s144 = smul.u32 2, %s32
          %p145 = scmp.lt.s32.totalorder %s144, 1
          %s146 = scalar_select %p145, %s144, 1
          %s147 = smul.addr %s146, 8
          %s148 = scalar_lea.vmem %s3, %s147
          %s149 = smul.u32 2, %s32
        $region20: #{hdnnp_forward.1} parent=11 // pred_fallthru
          _
        // Predicated region
        $region21: #{hdnnp_forward.1} parent=11 // pred_check
          %p150 = pneg %p102
        $region22: #{hdnnp_forward.1} parent=11 // pred_check_branch
          %152 = sbr.rel (%p150) target = $region24
        $region23: #{hdnnp_forward.1} parent=11 // pred_region
          _
        $region24: #{hdnnp_forward.1} parent=11 // pred_fallthru
          _
      $region12: #{hdnnp_forward.1} parent=5 // pred_fallthru
        _
      %p153 = scmp.lt.s32.totalorder %s22, 2
      // Predicated region
      $region25: #{hdnnp_forward.1} parent=5 // pred_check
        %p154 = pneg %p153
      $region26: #{hdnnp_forward.1} parent=5 // pred_check_branch
        %156 = sbr.rel (%p154) target = $region28
      $region27: #{hdnnp_forward.1} parent=5 // pred_region
        _
      $region28: #{hdnnp_forward.1} parent=5 // pred_fallthru
        _
      %p157 = scmp.le.s32.totalorder 1, %s22
      %p158 = scmp.lt.s32.totalorder %s22, 3
      %p159 = pnand %p157, %p158
      %p160 = pneg %p159
      // Predicated region
      $region29: #{hdnnp_forward.1} parent=5 // pred_check
        _
      $region30: #{hdnnp_forward.1} parent=5 // pred_check_branch
        %162 = sbr.rel (%p159) target = $region32
      $region31: #{hdnnp_forward.1} parent=5 // pred_region
        %s163 = ssub.s32 %s22, 1
        %p164 = pneg %p55
        %p165 = pneg %p52
        %s166 = smul.u32 2, %s32
        %p167 = scmp.lt.s32.totalorder %s166, 1
        %s168 = scalar_select %p167, %s166, 1
        %s169 = smul.addr %s168, 8
        %s170 = scalar_lea.vmem %s3, %s169
        %p171 = pneg %p81
        %p172 = pneg %p78
        %p173 = pneg %p102
        %p174 = pneg %p99
        %p175 = pneg %p123
        %p176 = pneg %p120
        %s177 = smul.u32 2, %s32
        %p178 = scmp.lt.s32.totalorder %s177, 1
        %s179 = scalar_select %p178, %s177, 1
        %s180 = smul.addr %s179, 8
        %s181 = scalar_lea.vmem %s3, %s180
        %s182 = smul.u32 2, %s32
        %p183 = scmp.eq.s32.totalorder %s31, 0
        %p184 = scmp.eq.s32.totalorder %s32, 0
        %p185 = pnand %p183, %p184
        %p186 = pneg %p185
        // Predicated region
        $region33: #{hdnnp_forward.1} parent=31 // pred_check
          _
        $region34: #{hdnnp_forward.1} parent=31 // pred_check_branch
          %188 = sbr.rel (%p185) target = $region36
        $region35: #{hdnnp_forward.1} parent=31 // pred_region
          %v189 = vld [vmem:[%s2] sm:$0xff]
          %v190 = vld [vmem:[%s4] sm:$0xf]
          %vm191 = vcmask 31744
          %v193 = vsel %vm191, %v189, 0
          %vm195 = vcmask 1043456
          %v197 = vsel %vm195, %v190, 0
          %199 = vmatprep.subr.mxu0 0.0
          %200 = vmatpush1.msra.mxu0 0.0
          %201 = vmatprep.subr.mxu0 0.0
          %202 = vmatpush1.msra.mxu0 0.0
          %203 = vmatprep.subr.mxu0 0.0
          %204 = vmatpush1.msra.mxu0 0.0
          %205 = vmatprep.subr.mxu0 0.0
          %206 = vmatpush1.msra.mxu0 0.0
          %207 = vmatprep.subr.mxu0 0.0
          %208 = vmatpush1.msra.mxu0 0.0
          %209 = vmatprep.subr.mxu0 0.0
          %210 = vmatpush1.msra.mxu0 0.0
          %211 = vmatprep.subr.mxu0 0.0
          %212 = vmatpush1.msra.mxu0 0.0
          %213 = vmatprep.subr.mxu0 0.0
          %214 = vmatpush1.msra.mxu0 0.0
          %215 = vmatprep.subr.mxu0 0.0
          %216 = vmatpush1.msra.mxu0 0.0
          %217 = vmatprep.subr.mxu0 0.0
          %218 = vmatpush1.msra.mxu0 0.0
          %219 = vmatprep.subr.mxu0 0.0
          %220 = vmatpush1.msra.mxu0 0.0
          %221 = vmatprep.subr.mxu0 0.0
          %222 = vmatpush1.msra.mxu0 0.0
          %223 = vmatprep.subr.mxu0 0.0
          %224 = vmatpush1.msra.mxu0 0.0
          %225 = vmatprep.subr.mxu0 0.0
          %226 = vmatpush1.msra.mxu0 0.0
          %227 = vmatprep.subr.mxu0 0.0
          %228 = vmatpush1.msra.mxu0 0.0
          %229 = vmatprep.subr.mxu0 0.0
          %230 = vmatpush1.msra.mxu0 %v197
          %231 = vmatprep.subr.mxu0 0.0
          %232 = vmatpush2.msra.mxu0 0.0
          %233 = vmatprep.subr.mxu0 0.0
          %234 = vmatpush2.msra.mxu0 0.0
          %235 = vmatprep.subr.mxu0 0.0
          %236 = vmatpush2.msra.mxu0 0.0
          %237 = vmatprep.subr.mxu0 0.0
          %238 = vmatpush2.msra.mxu0 0.0
          %239 = vmatprep.subr.mxu0 0.0
          %240 = vmatpush2.msra.mxu0 0.0
          %241 = vmatprep.subr.mxu0 0.0
          %242 = vmatpush2.msra.mxu0 0.0
          %243 = vmatprep.subr.mxu0 0.0
          %244 = vmatpush2.msra.mxu0 0.0
          %245 = vmatprep.subr.mxu0 0.0
          %246 = vmatpush2.msra.mxu0 0.0
          %247 = vmatprep.subr.mxu0 0.0
          %248 = vmatpush2.msra.mxu0 0.0
          %249 = vmatprep.subr.mxu0 0.0
          %250 = vmatpush2.msra.mxu0 0.0
          %251 = vmatprep.subr.mxu0 0.0
          %252 = vmatpush2.msra.mxu0 0.0
          %253 = vmatprep.subr.mxu0 0.0
          %254 = vmatpush2.msra.mxu0 0.0
          %255 = vmatprep.subr.mxu0 0.0
          %256 = vmatpush2.msra.mxu0 0.0
          %257 = vmatprep.subr.mxu0 0.0
          %258 = vmatpush2.msra.mxu0 0.0
          %259 = vmatprep.subr.mxu0 0.0
          %260 = vmatpush2.msra.mxu0 0.0
          %261 = vmatprep.subr.mxu0 0.0
          %262 = vmatpush2.msra.mxu0 0.0
          %263 = vmatprep.mubr.f32.mxu0 0.0
          %264 = vmatmul.mubr.f32.gmra.mxu0 %v193
          %v265 = vpop.f32.mrf.mxu0
          %v266 = vadd.f32 0.0, %v265
          %v267 = vpop.f32.mrf.mxu0
          %268 = vdwg.mxu0
          %vm269 = vcmask 130048
          %270 = vst.msk [vmem:[#allocation2] sm:$0xff] %vm269, %v266
          %v271 = vld [vmem:[%s4 + $0x8] sm:$0xff]
          %v272 = vld [vmem:[%s4 + $0x10] sm:$0xff]
          %v274 = vsel %vm269, %v266, 0
          %276 = vmatprep.subr.mxu0 0.0
          %277 = vmatpush1.msra.mxu0 0.0
          %278 = vmatprep.subr.mxu0 0.0
          %279 = vmatpush1.msra.mxu0 0.0
          %280 = vmatprep.subr.mxu0 0.0
          %281 = vmatpush1.msra.mxu0 0.0
          %282 = vmatprep.subr.mxu0 0.0
          %283 = vmatpush1.msra.mxu0 0.0
          %284 = vmatprep.subr.mxu0 0.0
          %285 = vmatpush1.msra.mxu0 0.0
          %286 = vmatprep.subr.mxu0 0.0
          %287 = vmatpush1.msra.mxu0 0.0
          %288 = vmatprep.subr.mxu0 0.0
          %289 = vmatpush1.msra.mxu0 0.0
          %290 = vmatprep.subr.mxu0 0.0
          %291 = vmatpush1.msra.mxu0 0.0
          %292 = vmatprep.subr.mxu0 0.0
          %293 = vmatpush1.msra.mxu0 0.0
          %294 = vmatprep.subr.mxu0 0.0
          %295 = vmatpush1.msra.mxu0 0.0
          %296 = vmatprep.subr.mxu0 0.0
          %297 = vmatpush1.msra.mxu0 0.0
          %298 = vmatprep.subr.mxu0 0.0
          %299 = vmatpush1.msra.mxu0 0.0
          %300 = vmatprep.subr.mxu0 0.0
          %301 = vmatpush1.msra.mxu0 0.0
          %302 = vmatprep.subr.mxu0 0.0
          %303 = vmatpush1.msra.mxu0 0.0
          %304 = vmatprep.subr.mxu0 0.0
          %305 = vmatpush1.msra.mxu0 %v272
          %306 = vmatprep.subr.mxu0 0.0
          %307 = vmatpush1.msra.mxu0 %v271
          %308 = vmatprep.subr.mxu0 0.0
          %309 = vmatpush2.msra.mxu0 0.0
          %310 = vmatprep.subr.mxu0 0.0
          %311 = vmatpush2.msra.mxu0 0.0
          %312 = vmatprep.subr.mxu0 0.0
          %313 = vmatpush2.msra.mxu0 0.0
          %314 = vmatprep.subr.mxu0 0.0
          %315 = vmatpush2.msra.mxu0 0.0
          %316 = vmatprep.subr.mxu0 0.0
          %317 = vmatpush2.msra.mxu0 0.0
          %318 = vmatprep.subr.mxu0 0.0
          %319 = vmatpush2.msra.mxu0 0.0
          %320 = vmatprep.subr.mxu0 0.0
          %321 = vmatpush2.msra.mxu0 0.0
          %322 = vmatprep.subr.mxu0 0.0
          %323 = vmatpush2.msra.mxu0 0.0
          %324 = vmatprep.subr.mxu0 0.0
          %325 = vmatpush2.msra.mxu0 0.0
          %326 = vmatprep.subr.mxu0 0.0
          %327 = vmatpush2.msra.mxu0 0.0
          %328 = vmatprep.subr.mxu0 0.0
          %329 = vmatpush2.msra.mxu0 0.0
          %330 = vmatprep.subr.mxu0 0.0
          %331 = vmatpush2.msra.mxu0 0.0
          %332 = vmatprep.subr.mxu0 0.0
          %333 = vmatpush2.msra.mxu0 0.0
          %334 = vmatprep.subr.mxu0 0.0
          %335 = vmatpush2.msra.mxu0 0.0
          %336 = vmatprep.subr.mxu0 0.0
          %337 = vmatpush2.msra.mxu0 0.0
          %338 = vmatprep.subr.mxu0 0.0
          %339 = vmatpush2.msra.mxu0 0.0
          %340 = vmatprep.mubr.f32.mxu0 0.0
          %341 = vmatmul.mubr.f32.gmra.mxu0 %v274
          %v342 = vpop.f32.mrf.mxu0
          %v343 = vadd.f32 0.0, %v342
          %v344 = vpop.f32.mrf.mxu0
          %345 = vdwg.mxu0
          %346 = vst.msk [vmem:[#allocation3] sm:$0xff] %vm269, %v343
          %348 = vrot.lane.b32.xlu0 %v343, 112
          %v349 = vpop.permute.xlu0 %348
          %v351 = vsel %vm269, %v349, 0.0
          %vm352 = vcmask 261120
          %353 = vst.msk [vmem:[#allocation5] sm:$0xff] %vm352, %v351
          %vm354 = vcmask 326656
          %355 = vst.msk [vmem:[#allocation6] sm:$0xff] %vm354, 0.0
        $region36: #{hdnnp_forward.1} parent=31 // pred_fallthru
          _
        %p356 = scmp.eq.s32.totalorder %s31, 1
        %p357 = pnand %p356, %p184
        %p358 = pneg %p357
        // Predicated region
        $region37: #{hdnnp_forward.1} parent=31 // pred_check
          _
        $region38: #{hdnnp_forward.1} parent=31 // pred_check_branch
          %360 = sbr.rel (%p357) target = $region40
        $region39: #{hdnnp_forward.1} parent=31 // pred_region
          %v361 = vld [vmem:[#allocation6] sm:$0xff]
          %v362 = vld [vmem:[#allocation3] sm:$0xff]
          %v363 = vadd.f32 %v361, %v362
          %v364 = vmul.f32 %v363, %v363
          %vm365 = vcmask 130048
          %v366 = vsel %vm365, %v364, 0.0
          %367 = vadd.xlane.f32.xlu0 %v366
          %v368 = vpop.xlane.xlu0 %367
          %v369 = vrcp.pop 16.0
          %v370 = vmul.f32 %v368, %v369
          %v371 = vadd.f32 %v370, 1e-05
          %v372 = vrsqrt.pop %v371
          %v373 = vmul.f32 %v361, %v361
          %375 = vrot.lane.b32.xlu0 %v373, 112
          %v376 = vpop.permute.xlu0 %375
          %vm378 = vcmask 195584
          %v379 = vsel %vm378, %v376, 0.0
          %380 = vadd.xlane.f32.xlu0 %v379
          %v381 = vpop.xlane.xlu0 %380
          %v382 = vrcp.pop 24.0
          %v383 = vmul.f32 %v381, %v382
          %v384 = vadd.f32 %v383, 1e-05
          %v385 = vrsqrt.pop %v384
          %v386 = vmul.f32 %v363, %v372
          %v387 = vld [vmem:[%s4 + $0x58] sm:$0x1]
          %v388 = vlaneseq
          %v389 = vshrl.u32 %v388, 7
          %v390 = vsub.s32 0, %v389
          %v391 = vrot.slane %v387, %v390
          %v392 = vmul.f32 %v386, %v391
          %v393 = vmul.f32 %v361, %v385
          %v394 = vld [vmem:[%s4 + $0x60] sm:$0x1]
          %v395 = vlaneseq
          %v396 = vshrl.u32 %v395, 7
          %v397 = vsub.s32 0, %v396
          %v398 = vrot.slane %v394, %v397
          %400 = vrot.lane.b32.xlu0 %v398, 16
          %v401 = vpop.permute.xlu0 %400
          %v403 = vmul.f32 %v393, %v401
          %v404 = vxor.u32 %v392, 2147483648
          %v405 = vmul.f32 %v404, 1.442695
          %v406 = vpow.pop %v405
          %v407 = vadd.f32 %v406, 1.0
          %v408 = vrcp.pop %v407
          %v409 = vmul.f32 1.0, %v408
          %v410 = vmul.f32 %v392, %v409
          %412 = vrot.lane.b32.xlu0 %v410, 120
          %v413 = vpop.permute.xlu0 %412
          %415 = vrot.lane.b32.xlu0 %v410, 8
          %v416 = vpop.permute.xlu0 %415
          %vm418 = vcmask 64512
          %v419 = vsel %vm418, %v413, %v410
          %v420 = vsel %vm365, %v419, %v416
          %422 = vrot.lane.b32.xlu0 %v420, 16
          %v423 = vpop.permute.xlu0 %422
          %v425 = vmul.f32 %v403, %v423
          %v426 = vld [vmem:[%s4 + $0x18] sm:$0xff]
          %v427 = vsel %vm418, %v410, 0
          %429 = vmatprep.subr.mxu0 0.0
          %430 = vmatpush1.msra.mxu0 0.0
          %431 = vmatprep.subr.mxu0 0.0
          %432 = vmatpush1.msra.mxu0 0.0
          %433 = vmatprep.subr.mxu0 0.0
          %434 = vmatpush1.msra.mxu0 0.0
          %435 = vmatprep.subr.mxu0 0.0
          %436 = vmatpush1.msra.mxu0 0.0
          %437 = vmatprep.subr.mxu0 0.0
          %438 = vmatpush1.msra.mxu0 0.0
          %439 = vmatprep.subr.mxu0 0.0
          %440 = vmatpush1.msra.mxu0 0.0
          %441 = vmatprep.subr.mxu0 0.0
          %442 = vmatpush1.msra.mxu0 0.0
          %443 = vmatprep.subr.mxu0 0.0
          %444 = vmatpush1.msra.mxu0 0.0
          %445 = vmatprep.subr.mxu0 0.0
          %446 = vmatpush1.msra.mxu0 0.0
          %447 = vmatprep.subr.mxu0 0.0
          %448 = vmatpush1.msra.mxu0 0.0
          %449 = vmatprep.subr.mxu0 0.0
          %450 = vmatpush1.msra.mxu0 0.0
          %451 = vmatprep.subr.mxu0 0.0
          %452 = vmatpush1.msra.mxu0 0.0
          %453 = vmatprep.subr.mxu0 0.0
          %454 = vmatpush1.msra.mxu0 0.0
          %455 = vmatprep.subr.mxu0 0.0
          %456 = vmatpush1.msra.mxu0 0.0
          %457 = vmatprep.subr.mxu0 0.0
          %458 = vmatpush1.msra.mxu0 0.0
          %459 = vmatprep.subr.mxu0 0.0
          %460 = vmatpush1.msra.mxu0 %v426
          %461 = vmatprep.subr.mxu0 0.0
          %462 = vmatpush2.msra.mxu0 0.0
          %463 = vmatprep.subr.mxu0 0.0
          %464 = vmatpush2.msra.mxu0 0.0
          %465 = vmatprep.subr.mxu0 0.0
          %466 = vmatpush2.msra.mxu0 0.0
          %467 = vmatprep.subr.mxu0 0.0
          %468 = vmatpush2.msra.mxu0 0.0
          %469 = vmatprep.subr.mxu0 0.0
          %470 = vmatpush2.msra.mxu0 0.0
          %471 = vmatprep.subr.mxu0 0.0
          %472 = vmatpush2.msra.mxu0 0.0
          %473 = vmatprep.subr.mxu0 0.0
          %474 = vmatpush2.msra.mxu0 0.0
          %475 = vmatprep.subr.mxu0 0.0
          %476 = vmatpush2.msra.mxu0 0.0
          %477 = vmatprep.subr.mxu0 0.0
          %478 = vmatpush2.msra.mxu0 0.0
          %479 = vmatprep.subr.mxu0 0.0
          %480 = vmatpush2.msra.mxu0 0.0
          %481 = vmatprep.subr.mxu0 0.0
          %482 = vmatpush2.msra.mxu0 0.0
          %483 = vmatprep.subr.mxu0 0.0
          %484 = vmatpush2.msra.mxu0 0.0
          %485 = vmatprep.subr.mxu0 0.0
          %486 = vmatpush2.msra.mxu0 0.0
          %487 = vmatprep.subr.mxu0 0.0
          %488 = vmatpush2.msra.mxu0 0.0
          %489 = vmatprep.subr.mxu0 0.0
          %490 = vmatpush2.msra.mxu0 0.0
          %491 = vmatprep.subr.mxu0 0.0
          %492 = vmatpush2.msra.mxu0 0.0
          %493 = vmatprep.mubr.f32.mxu0 0.0
          %494 = vmatmul.mubr.f32.gmra.mxu0 %v427
          %v495 = vpop.f32.mrf.mxu0
          %v496 = vadd.f32 0.0, %v495
          %v497 = vpop.f32.mrf.mxu0
          %498 = vdwg.mxu0
          %499 = vst.msk [vmem:[#allocation4] sm:$0xff] %vm365, %v496
          %v500 = vld [vmem:[%s4 + $0x20] sm:$0xff]
          %v501 = vld [vmem:[%s4 + $0x28] sm:$0xff]
          %v502 = vld [vmem:[%s4 + $0x30] sm:$0xff]
          %504 = vrot.lane.b32.xlu0 %v425, 112
          %v505 = vpop.permute.xlu0 %504
          %v506 = vsel %vm378, %v505, 0
          %508 = vmatprep.subr.mxu0 0.0
          %509 = vmatpush1.msra.mxu0 0.0
          %510 = vmatprep.subr.mxu0 0.0
          %511 = vmatpush1.msra.mxu0 0.0
          %512 = vmatprep.subr.mxu0 0.0
          %513 = vmatpush1.msra.mxu0 0.0
          %514 = vmatprep.subr.mxu0 0.0
          %515 = vmatpush1.msra.mxu0 0.0
          %516 = vmatprep.subr.mxu0 0.0
          %517 = vmatpush1.msra.mxu0 0.0
          %518 = vmatprep.subr.mxu0 0.0
          %519 = vmatpush1.msra.mxu0 0.0
          %520 = vmatprep.subr.mxu0 0.0
          %521 = vmatpush1.msra.mxu0 0.0
          %522 = vmatprep.subr.mxu0 0.0
          %523 = vmatpush1.msra.mxu0 0.0
          %524 = vmatprep.subr.mxu0 0.0
          %525 = vmatpush1.msra.mxu0 0.0
          %526 = vmatprep.subr.mxu0 0.0
          %527 = vmatpush1.msra.mxu0 0.0
          %528 = vmatprep.subr.mxu0 0.0
          %529 = vmatpush1.msra.mxu0 0.0
          %530 = vmatprep.subr.mxu0 0.0
          %531 = vmatpush1.msra.mxu0 0.0
          %532 = vmatprep.subr.mxu0 0.0
          %533 = vmatpush1.msra.mxu0 0.0
          %534 = vmatprep.subr.mxu0 0.0
          %535 = vmatpush1.msra.mxu0 %v502
          %536 = vmatprep.subr.mxu0 0.0
          %537 = vmatpush1.msra.mxu0 %v501
          %538 = vmatprep.subr.mxu0 0.0
          %539 = vmatpush1.msra.mxu0 %v500
          %540 = vmatprep.subr.mxu0 0.0
          %541 = vmatpush2.msra.mxu0 0.0
          %542 = vmatprep.subr.mxu0 0.0
          %543 = vmatpush2.msra.mxu0 0.0
          %544 = vmatprep.subr.mxu0 0.0
          %545 = vmatpush2.msra.mxu0 0.0
          %546 = vmatprep.subr.mxu0 0.0
          %547 = vmatpush2.msra.mxu0 0.0
          %548 = vmatprep.subr.mxu0 0.0
          %549 = vmatpush2.msra.mxu0 0.0
          %550 = vmatprep.subr.mxu0 0.0
          %551 = vmatpush2.msra.mxu0 0.0
          %552 = vmatprep.subr.mxu0 0.0
          %553 = vmatpush2.msra.mxu0 0.0
          %554 = vmatprep.subr.mxu0 0.0
          %555 = vmatpush2.msra.mxu0 0.0
          %556 = vmatprep.subr.mxu0 0.0
          %557 = vmatpush2.msra.mxu0 0.0
          %558 = vmatprep.subr.mxu0 0.0
          %559 = vmatpush2.msra.mxu0 0.0
          %560 = vmatprep.subr.mxu0 0.0
          %561 = vmatpush2.msra.mxu0 0.0
          %562 = vmatprep.subr.mxu0 0.0
          %563 = vmatpush2.msra.mxu0 0.0
          %564 = vmatprep.subr.mxu0 0.0
          %565 = vmatpush2.msra.mxu0 0.0
          %566 = vmatprep.subr.mxu0 0.0
          %567 = vmatpush2.msra.mxu0 0.0
          %568 = vmatprep.subr.mxu0 0.0
          %569 = vmatpush2.msra.mxu0 0.0
          %570 = vmatprep.subr.mxu0 0.0
          %571 = vmatpush2.msra.mxu0 0.0
          %572 = vmatprep.mubr.f32.mxu0 0.0
          %573 = vmatmul.mubr.f32.gmra.mxu0 %v506
          %v574 = vpop.f32.mrf.mxu0
          %v575 = vadd.f32 0.0, %v574
          %v576 = vpop.f32.mrf.mxu0
          %577 = vdwg.mxu0
          %579 = vrot.lane.b32.xlu0 %v496, 112
          %v580 = vpop.permute.xlu0 %579
          %583 = vrot.lane.b32.xlu0 %v575, 8
          %v584 = vpop.permute.xlu0 %583
          %v586 = vsel %vm418, %v580, %v584
          %vm587 = vcmask 261120
          %588 = vst.msk [vmem:[#allocation5] sm:$0xff] %vm587, %v586
          %vm589 = vcmask 326656
          %590 = vst.msk [vmem:[#allocation6] sm:$0xff] %vm589, 0.0
        $region40: #{hdnnp_forward.1} parent=31 // pred_fallthru
          _
        %s591 = smul.u32 %s32, 16
        %v592 = vld [vmem:[%s181] sm:$0xff]
        %v593 = vld [vmem:[%s181 + $0x8] sm:$0xff]
        %v594 = vmul.f32 %v592, %v592
        %v595 = vmul.f32 %v593, %v593
        %vm596 = vcmask 23552
        %v597 = vsel %vm596, %v594, 0.0
        %598 = vadd.xlane.f32.xlu0 %v597
        %v599 = vpop.xlane.xlu0 %598
        %v600 = vsel %vm596, %v595, 0.0
        %601 = vadd.xlane.f32.xlu0 %v600
        %v602 = vpop.xlane.xlu0 %601
        %v603 = vmax.f32 %v599, 1e-12
        %v604 = vmax.f32 %v602, 1e-12
        %v605 = vrsqrt.pop %v603
        %v606 = vrsqrt.pop %v604
        %v607 = vmul.f32 %v603, %v605
        %v608 = vmul.f32 %v604, %v606
        %v609 = vmul.f32 %v605, 1.7320508
        %v610 = vmul.f32 %v606, 1.7320508
        %v611 = vmul.f32 %v592, %v609
        %v612 = vmul.f32 %v593, %v610
        %v613 = vlaneseq
        %v614 = vand.u32 %v613, 127
        %v615 = vcvt.s32.f32 %v614
        %v616 = vadd.f32 %v615, 1.0
        %v617 = vmul.f32 %v616, 0.5235988
        %v618 = vmul.f32 %v607, %v617
        %v619 = vmul.f32 %v608, %v617
        %v620 = vand.u32 2147483647, %v618
        %vm621 = vcmp.le.f32.partialorder %v620, 0.7853982
        %vm622 = vcmp.lt.s32.totalorder %v618, 0
        %v623 = vand.u32 %v618, 2139095040
        %v624 = vshrl.u32 %v623, 23
        %v625 = vsub.s32 %v624, 127
        %v626 = vand.u32 2147483647, %v618
        %v627 = vand.u32 %v626, 8388607
        %v628 = vor.u32 %v627, 8388608
        %v629 = vsub.s32 0, %v628
        %v630 = vadd.s32 %v625, 1
        %vm631 = vcmp.gt.s32.totalorder %v630, 0
        %v632 = vsel %vm631, %v630, 0
        %v633 = vshrl.u32 %v632, 5
        %v634 = vand.u32 %v632, 31
        %v635 = vsub.s32 32, %v634
        %v636 = vshrl.u32 683565275, %v635
        %v637 = vshll.u32 683565275, %v634
        %v638 = vshrl.u32 2475754826, %v635
        %v639 = vor.u32 %v637, %v638
        %v640 = vshll.u32 2475754826, %v634
        %v641 = vshrl.u32 2131351028, %v635
        %v642 = vor.u32 %v640, %v641
        %v643 = vshll.u32 2131351028, %v634
        %v644 = vshrl.u32 2102212464, %v635
        %v645 = vor.u32 %v643, %v644
        %v646 = vshll.u32 2102212464, %v634
        %v647 = vshrl.u32 920167782, %v635
        %v648 = vor.u32 %v646, %v647
        %v649 = vshll.u32 920167782, %v634
        %v650 = vshrl.u32 1326507024, %v635
        %v651 = vor.u32 %v649, %v650
        %vm652 = vcmp.lt.s32.totalorder %v633, 1
        %vm653 = vcmp.lt.s32.totalorder %v633, 2
        %vm654 = vcmp.lt.s32.totalorder %v633, 3
        %vm655 = vcmp.lt.s32.totalorder %v633, 4
        %v656 = vsel %vm652, %v636, %v639
        %v657 = vsel %vm655, %v645, 2102212464
        %v658 = vsel %vm654, %v642, %v657
        %v659 = vsel %vm653, %v656, %v658
        %v660 = vsel %vm652, %v639, %v642
        %v661 = vsel %vm655, %v648, 920167782
        %v662 = vsel %vm654, %v645, %v661
        %v663 = vsel %vm653, %v660, %v662
        %v664 = vsel %vm652, %v642, %v645
        %v665 = vsel %vm655, %v651, 1326507024
        %v666 = vsel %vm654, %v648, %v665
        %v667 = vsel %vm653, %v664, %v666
        %v668 = vshll.u32 %v628, 8
        %v669 = vmul.u32.u64.compose %v668, %v667
        %v670 = vextract.low.u32 %v669
        %v671 = vextract.high.u32 %v669
        %v672 = vmul.u32.u64.compose %v668, %v663
        %v673 = vextract.low.u32 %v672
        %v674 = vextract.high.u32 %v672
        %v675 = vmul.u32 %v668, %v659
        %v676 = vadd.s32 %v671, %v673
        %vm677 = vc.u32 %v671, %v673
        %v678 = vadd.s32 %v674, 1
        %v679 = vsel %vm677, %v678, %v674
        %v680 = vadd.s32 %v675, %v679
        %v681 = vadd.s32 %v680, 536870912
        %v682 = vshrl.u32 %v681, 30
        %v683 = vshll.u32 %v682, 30
        %v684 = vsub.s32 %v680, %v683
        %vm685 = vcmp.lt.s32.totalorder %v684, 0
        %v686 = vsub.s32 0, %v684
        %v687 = vsel %vm685, %v686, %v684
        %v688 = vclz %v687
        %v689 = vsub.s32 %v688, 2
        %vm690 = vcmp.gt.s32.totalorder 0, %v689
        %v691 = vsel %vm690, 0, %v689
        %v692 = vsub.s32 32, %v691
        %v693 = vshll.u32 %v684, %v691
        %v694 = vshrl.u32 %v676, %v692
        %v695 = vor.u32 %v693, %v694
        %v696 = vsub.s32 4294967266, %v691
        %v697 = vadd.s32 %v696, 127
        %v698 = vshll.u32 %v697, 23
        %v699 = vor.u32 4788187, %v698
        %v700 = vand.u32 2147483647, %v699
        %v702 = vcvt.s32.f32 %v695
        %v703 = vmul.f32 %v702, %v700
        %v704 = vxor.u32 %v703, 2147483648
        %v705 = vsel %vm622, %v704, %v703
        %v706 = vsub.s32 4, %v682
        %v707 = vsel %vm622, %v706, %v682
        %v708 = vsel %vm621, %v618, %v705
        %v709 = vsel %vm621, 0, %v707
        %v710 = vcosq.f32.pop %v708
        %v711 = vsinq.f32.pop %v708
        %vm712 = vweird.f32 %v618
        %v713 = vadd.s32 %v709, 3
        %v714 = vand.u32 %v713, 3
        %vm715 = vcmp.lt.s32.totalorder %v714, 2
        %vm716 = vcmp.eq.s32.totalorder %v714, 0
        %v717 = vxor.u32 %v711, 2147483648
        %v718 = vsel %vm716, %v710, %v717
        %vm719 = vcmp.eq.s32.totalorder %v714, 2
        %v720 = vxor.u32 %v710, 2147483648
        %v721 = vsel %vm719, %v720, %v711
        %v722 = vsel %vm715, %v718, %v721
        %v723 = vsel %vm712, nan, %v722
        %v724 = vand.u32 2147483647, %v619
        %vm725 = vcmp.le.f32.partialorder %v724, 0.7853982
        %vm726 = vcmp.lt.s32.totalorder %v619, 0
        %v727 = vand.u32 %v619, 2139095040
        %v728 = vshrl.u32 %v727, 23
        %v729 = vsub.s32 %v728, 127
        %v730 = vand.u32 2147483647, %v619
        %v731 = vand.u32 %v730, 8388607
        %v732 = vor.u32 %v731, 8388608
        %v733 = vsub.s32 0, %v732
        %v734 = vadd.s32 %v729, 1
        %vm735 = vcmp.gt.s32.totalorder %v734, 0
        %v736 = vsel %vm735, %v734, 0
        %v737 = vshrl.u32 %v736, 5
        %v738 = vand.u32 %v736, 31
        %v739 = vsub.s32 32, %v738
        %v740 = vshrl.u32 683565275, %v739
        %v741 = vshll.u32 683565275, %v738
        %v742 = vshrl.u32 2475754826, %v739
        %v743 = vor.u32 %v741, %v742
        %v744 = vshll.u32 2475754826, %v738
        %v745 = vshrl.u32 2131351028, %v739
        %v746 = vor.u32 %v744, %v745
        %v747 = vshll.u32 2131351028, %v738
        %v748 = vshrl.u32 2102212464, %v739
        %v749 = vor.u32 %v747, %v748
        %v750 = vshll.u32 2102212464, %v738
        %v751 = vshrl.u32 920167782, %v739
        %v752 = vor.u32 %v750, %v751
        %v753 = vshll.u32 920167782, %v738
        %v754 = vshrl.u32 1326507024, %v739
        %v755 = vor.u32 %v753, %v754
        %vm756 = vcmp.lt.s32.totalorder %v737, 1
        %vm757 = vcmp.lt.s32.totalorder %v737, 2
        %vm758 = vcmp.lt.s32.totalorder %v737, 3
        %vm759 = vcmp.lt.s32.totalorder %v737, 4
        %v760 = vsel %vm756, %v740, %v743
        %v761 = vsel %vm759, %v749, 2102212464
        %v762 = vsel %vm758, %v746, %v761
        %v763 = vsel %vm757, %v760, %v762
        %v764 = vsel %vm756, %v743, %v746
        %v765 = vsel %vm759, %v752, 920167782
        %v766 = vsel %vm758, %v749, %v765
        %v767 = vsel %vm757, %v764, %v766
        %v768 = vsel %vm756, %v746, %v749
        %v769 = vsel %vm759, %v755, 1326507024
        %v770 = vsel %vm758, %v752, %v769
        %v771 = vsel %vm757, %v768, %v770
        %v772 = vshll.u32 %v732, 8
        %v773 = vmul.u32.u64.compose %v772, %v771
        %v774 = vextract.low.u32 %v773
        %v775 = vextract.high.u32 %v773
        %v776 = vmul.u32.u64.compose %v772, %v767
        %v777 = vextract.low.u32 %v776
        %v778 = vextract.high.u32 %v776
        %v779 = vmul.u32 %v772, %v763
        %v780 = vadd.s32 %v775, %v777
        %vm781 = vc.u32 %v775, %v777
        %v782 = vadd.s32 %v778, 1
        %v783 = vsel %vm781, %v782, %v778
        %v784 = vadd.s32 %v779, %v783
        %v785 = vadd.s32 %v784, 536870912
        %v786 = vshrl.u32 %v785, 30
        %v787 = vshll.u32 %v786, 30
        %v788 = vsub.s32 %v784, %v787
        %vm789 = vcmp.lt.s32.totalorder %v788, 0
        %v790 = vsub.s32 0, %v788
        %v791 = vsel %vm789, %v790, %v788
        %v792 = vclz %v791
        %v793 = vsub.s32 %v792, 2
        %vm794 = vcmp.gt.s32.totalorder 0, %v793
        %v795 = vsel %vm794, 0, %v793
        %v796 = vsub.s32 32, %v795
        %v797 = vshll.u32 %v788, %v795
        %v798 = vshrl.u32 %v780, %v796
        %v799 = vor.u32 %v797, %v798
        %v800 = vsub.s32 4294967266, %v795
        %v801 = vadd.s32 %v800, 127
        %v802 = vshll.u32 %v801, 23
        %v803 = vor.u32 4788187, %v802
        %v804 = vand.u32 2147483647, %v803
        %v806 = vcvt.s32.f32 %v799
        %v807 = vmul.f32 %v806, %v804
        %v808 = vxor.u32 %v807, 2147483648
        %v809 = vsel %vm726, %v808, %v807
        %v810 = vsub.s32 4, %v786
        %v811 = vsel %vm726, %v810, %v786
        %v812 = vsel %vm725, %v619, %v809
        %v813 = vsel %vm725, 0, %v811
        %v814 = vcosq.f32.pop %v812
        %v815 = vsinq.f32.pop %v812
        %vm816 = vweird.f32 %v619
        %v817 = vadd.s32 %v813, 3
        %v818 = vand.u32 %v817, 3
        %vm819 = vcmp.lt.s32.totalorder %v818, 2
        %vm820 = vcmp.eq.s32.totalorder %v818, 0
        %v821 = vxor.u32 %v815, 2147483648
        %v822 = vsel %vm820, %v814, %v821
        %vm823 = vcmp.eq.s32.totalorder %v818, 2
        %v824 = vxor.u32 %v814, 2147483648
        %v825 = vsel %vm823, %v824, %v815
        %v826 = vsel %vm819, %v822, %v825
        %v827 = vsel %vm816, nan, %v826
        %v828 = vmul.f32 %v605, 0.33333334
        %v829 = vmul.f32 %v606, 0.33333334
        %v830 = vmul.f32 %v723, %v828
        %v831 = vmul.f32 %v827, %v829
        %v832 = vmul.f32 %v607, 0.16666667
        %v833 = vmul.f32 %v608, 0.16666667
        %v834 = vmul.f32 %v832, %v832
        %v835 = vmul.f32 %v833, %v833
        %v836 = vmul.f32 %v834, %v834
        %v837 = vmul.f32 %v835, %v835
        %v838 = vmul.f32 %v836, %v834
        %v839 = vmul.f32 %v837, %v835
        %v840 = vmul.f32 %v838, 28.0
        %v841 = vmul.f32 %v839, 28.0
        %v842 = vsub.f32 1.0, %v840
        %v843 = vsub.f32 1.0, %v841
        %v844 = vmul.f32 %v838, 48.0
        %v845 = vmul.f32 %v839, 48.0
        %v846 = vmul.f32 %v844, %v832
        %v847 = vmul.f32 %v845, %v833
        %v848 = vadd.f32 %v842, %v846
        %v849 = vadd.f32 %v843, %v847
        %v850 = vmul.f32 %v838, 21.0
        %v851 = vmul.f32 %v839, 21.0
        %v852 = vmul.f32 %v850, %v834
        %v853 = vmul.f32 %v851, %v835
        %v854 = vsub.f32 %v848, %v852
        %v855 = vsub.f32 %v849, %v853
        %vm856 = vcmp.lt.f32.partialorder %v832, 1.0
        %vm857 = vcmp.lt.f32.partialorder %v833, 1.0
        %v858 = vsel %vm856, %v854, 0.0
        %v859 = vsel %vm857, %v855, 0.0
        %v860 = vmul.f32 %v830, %v858
        %v861 = vmul.f32 %v831, %v859
        %v862 = vlaneseq
        %v863 = vshrl.u32 %v862, 7
        %v864 = vadd.s32 %v863, 8
        %v865 = vstv %s591
        %v866 = vadd.s32 %v863, %v865
        %v867 = vadd.s32 %v864, %v865
        %vm868 = vcmp.lt.s32.totalorder %v866, 16
        %vm869 = vcmp.lt.s32.totalorder %v867, 16
        %v870 = vsel %vm868, 1, 0
        %v871 = vsel %vm869, 1, 0
        %v872 = vcvt.s32.f32 %v870
        %v873 = vcvt.s32.f32 %v871
        loop: start=0, step=1, limit=16
        $region41: #{hdnnp_forward.1} parent=31 // loop_pre_header
          _
        $region42: #{hdnnp_forward.1} parent=31 // loop_header
          %s875 = sphi 0, %s879
          %p876 = scmp.ge.s32.totalorder %s875, 16
        $region43: #{hdnnp_forward.1} parent=31 // loop_header_branch
          %878 = sbr.rel (%p876) target = $region47
        $region44: #{hdnnp_forward.1} parent=31 // loop_body
          %s880 = sadd.s32 %s591, %s875
          %s881 = sld [smem:[#allocation11 + %s880]]
          %s882 = scalar_lea.vmem [#allocation5], %s881
          %v883 = vld [vmem:[%s882] sm:$0x1]
          %s884 = scalar_lea.vmem [#allocation7], %s875
          %vm885 = vcmask 253952
          %886 = vst.msk [vmem:[%s884] sm:$0x1] %vm885, %v883
        $region45: #{hdnnp_forward.1} parent=31 // loop_footer
          %s879 = sadd.s32 1, %s875
        $region46: #{hdnnp_forward.1} parent=31 // loop_footer_branch
          %874 = sbr.rel target = $region42
        $region47: #{hdnnp_forward.1} parent=31 // loop_exit
          _
        // Predicated region
        $region48: #{hdnnp_forward.1} parent=31 // pred_check
          %p887 = pneg %p183
        $region49: #{hdnnp_forward.1} parent=31 // pred_check_branch
          %889 = sbr.rel (%p887) target = $region51
        $region50: #{hdnnp_forward.1} parent=31 // pred_region
          %v890 = vld [vmem:[%s4 + $0x78] sm:$0xff]
          %vm891 = vcmask 64512
          %v893 = vsel %vm891, %v860, 0
          %v896 = vsel %vm891, %v861, 0
          %898 = vmatprep.subr.mxu0 0.0
          %899 = vmatpush1.msra.mxu0 0.0
          %900 = vmatprep.subr.mxu0 0.0
          %901 = vmatpush1.msra.mxu0 0.0
          %902 = vmatprep.subr.mxu0 0.0
          %903 = vmatpush1.msra.mxu0 0.0
          %904 = vmatprep.subr.mxu0 0.0
          %905 = vmatpush1.msra.mxu0 0.0
          %906 = vmatprep.subr.mxu0 0.0
          %907 = vmatpush1.msra.mxu0 0.0
          %908 = vmatprep.subr.mxu0 0.0
          %909 = vmatpush1.msra.mxu0 0.0
          %910 = vmatprep.subr.mxu0 0.0
          %911 = vmatpush1.msra.mxu0 0.0
          %912 = vmatprep.subr.mxu0 0.0
          %913 = vmatpush1.msra.mxu0 0.0
          %914 = vmatprep.subr.mxu0 0.0
          %915 = vmatpush1.msra.mxu0 0.0
          %916 = vmatprep.subr.mxu0 0.0
          %917 = vmatpush1.msra.mxu0 0.0
          %918 = vmatprep.subr.mxu0 0.0
          %919 = vmatpush1.msra.mxu0 0.0
          %920 = vmatprep.subr.mxu0 0.0
          %921 = vmatpush1.msra.mxu0 0.0
          %922 = vmatprep.subr.mxu0 0.0
          %923 = vmatpush1.msra.mxu0 0.0
          %924 = vmatprep.subr.mxu0 0.0
          %925 = vmatpush1.msra.mxu0 0.0
          %926 = vmatprep.subr.mxu0 0.0
          %927 = vmatpush1.msra.mxu0 0.0
          %928 = vmatprep.subr.mxu0 0.0
          %929 = vmatpush1.msra.mxu0 %v890
          %930 = vmatprep.subr.mxu0 0.0
          %931 = vmatpush2.msra.mxu0 0.0
          %932 = vmatprep.subr.mxu0 0.0
          %933 = vmatpush2.msra.mxu0 0.0
          %934 = vmatprep.subr.mxu0 0.0
          %935 = vmatpush2.msra.mxu0 0.0
          %936 = vmatprep.subr.mxu0 0.0
          %937 = vmatpush2.msra.mxu0 0.0
          %938 = vmatprep.subr.mxu0 0.0
          %939 = vmatpush2.msra.mxu0 0.0
          %940 = vmatprep.subr.mxu0 0.0
          %941 = vmatpush2.msra.mxu0 0.0
          %942 = vmatprep.subr.mxu0 0.0
          %943 = vmatpush2.msra.mxu0 0.0
          %944 = vmatprep.subr.mxu0 0.0
          %945 = vmatpush2.msra.mxu0 0.0
          %946 = vmatprep.subr.mxu0 0.0
          %947 = vmatpush2.msra.mxu0 0.0
          %948 = vmatprep.subr.mxu0 0.0
          %949 = vmatpush2.msra.mxu0 0.0
          %950 = vmatprep.subr.mxu0 0.0
          %951 = vmatpush2.msra.mxu0 0.0
          %952 = vmatprep.subr.mxu0 0.0
          %953 = vmatpush2.msra.mxu0 0.0
          %954 = vmatprep.subr.mxu0 0.0
          %955 = vmatpush2.msra.mxu0 0.0
          %956 = vmatprep.subr.mxu0 0.0
          %957 = vmatpush2.msra.mxu0 0.0
          %958 = vmatprep.subr.mxu0 0.0
          %959 = vmatpush2.msra.mxu0 0.0
          %960 = vmatprep.subr.mxu0 0.0
          %961 = vmatpush2.msra.mxu0 0.0
          %962 = vmatprep.mubr.f32.mxu0 0.0
          %963 = vmatmul.mubr.f32.gmra.mxu0 %v893
          %v964 = vpop.f32.mrf.mxu0
          %v965 = vadd.f32 0.0, %v964
          %v966 = vpop.f32.mrf.mxu0
          %967 = vmatprep.mubr.f32.mxu0 0.0
          %968 = vmatmul.mubr.f32.gmra.mxu0 %v896
          %v969 = vpop.f32.mrf.mxu0
          %v970 = vadd.f32 0.0, %v969
          %v971 = vpop.f32.mrf.mxu0
          %972 = vdwg.mxu0
          %v973 = vxor.u32 %v965, 2147483648
          %v974 = vxor.u32 %v970, 2147483648
          %v975 = vmul.f32 %v973, 1.442695
          %v976 = vpow.pop %v975
          %v977 = vmul.f32 %v974, 1.442695
          %v978 = vpow.pop %v977
          %v979 = vadd.f32 %v976, 1.0
          %v980 = vadd.f32 %v978, 1.0
          %v981 = vrcp.pop %v979
          %v982 = vmul.f32 1.0, %v981
          %v983 = vrcp.pop %v980
          %v984 = vmul.f32 1.0, %v983
          %v985 = vmul.f32 %v965, %v982
          %v986 = vmul.f32 %v970, %v984
          %v987 = vld [vmem:[%s4 + $0x80] sm:$0xff]
          %v988 = vld [vmem:[%s4 + $0x88] sm:$0xff]
          %vm989 = vcmask 130048
          %v991 = vsel %vm989, %v985, 0
          %v994 = vsel %vm989, %v986, 0
          %996 = vmatprep.subr.mxu0 0.0
          %997 = vmatpush1.msra.mxu0 0.0
          %998 = vmatprep.subr.mxu0 0.0
          %999 = vmatpush1.msra.mxu0 0.0
          %1000 = vmatprep.subr.mxu0 0.0
          %1001 = vmatpush1.msra.mxu0 0.0
          %1002 = vmatprep.subr.mxu0 0.0
          %1003 = vmatpush1.msra.mxu0 0.0
          %1004 = vmatprep.subr.mxu0 0.0
          %1005 = vmatpush1.msra.mxu0 0.0
          %1006 = vmatprep.subr.mxu0 0.0
          %1007 = vmatpush1.msra.mxu0 0.0
          %1008 = vmatprep.subr.mxu0 0.0
          %1009 = vmatpush1.msra.mxu0 0.0
          %1010 = vmatprep.subr.mxu0 0.0
          %1011 = vmatpush1.msra.mxu0 0.0
          %1012 = vmatprep.subr.mxu0 0.0
          %1013 = vmatpush1.msra.mxu0 0.0
          %1014 = vmatprep.subr.mxu0 0.0
          %1015 = vmatpush1.msra.mxu0 0.0
          %1016 = vmatprep.subr.mxu0 0.0
          %1017 = vmatpush1.msra.mxu0 0.0
          %1018 = vmatprep.subr.mxu0 0.0
          %1019 = vmatpush1.msra.mxu0 0.0
          %1020 = vmatprep.subr.mxu0 0.0
          %1021 = vmatpush1.msra.mxu0 0.0
          %1022 = vmatprep.subr.mxu0 0.0
          %1023 = vmatpush1.msra.mxu0 0.0
          %1024 = vmatprep.subr.mxu0 0.0
          %1025 = vmatpush1.msra.mxu0 %v988
          %1026 = vmatprep.subr.mxu0 0.0
          %1027 = vmatpush1.msra.mxu0 %v987
          %1028 = vmatprep.subr.mxu0 0.0
          %1029 = vmatpush2.msra.mxu0 0.0
          %1030 = vmatprep.subr.mxu0 0.0
          %1031 = vmatpush2.msra.mxu0 0.0
          %1032 = vmatprep.subr.mxu0 0.0
          %1033 = vmatpush2.msra.mxu0 0.0
          %1034 = vmatprep.subr.mxu0 0.0
          %1035 = vmatpush2.msra.mxu0 0.0
          %1036 = vmatprep.subr.mxu0 0.0
          %1037 = vmatpush2.msra.mxu0 0.0
          %1038 = vmatprep.subr.mxu0 0.0
          %1039 = vmatpush2.msra.mxu0 0.0
          %1040 = vmatprep.subr.mxu0 0.0
          %1041 = vmatpush2.msra.mxu0 0.0
          %1042 = vmatprep.subr.mxu0 0.0
          %1043 = vmatpush2.msra.mxu0 0.0
          %1044 = vmatprep.subr.mxu0 0.0
          %1045 = vmatpush2.msra.mxu0 0.0
          %1046 = vmatprep.subr.mxu0 0.0
          %1047 = vmatpush2.msra.mxu0 0.0
          %1048 = vmatprep.subr.mxu0 0.0
          %1049 = vmatpush2.msra.mxu0 0.0
          %1050 = vmatprep.subr.mxu0 0.0
          %1051 = vmatpush2.msra.mxu0 0.0
          %1052 = vmatprep.subr.mxu0 0.0
          %1053 = vmatpush2.msra.mxu0 0.0
          %1054 = vmatprep.subr.mxu0 0.0
          %1055 = vmatpush2.msra.mxu0 0.0
          %1056 = vmatprep.subr.mxu0 0.0
          %1057 = vmatpush2.msra.mxu0 0.0
          %1058 = vmatprep.subr.mxu0 0.0
          %1059 = vmatpush2.msra.mxu0 0.0
          %1060 = vmatprep.mubr.f32.mxu0 0.0
          %1061 = vmatmul.mubr.f32.gmra.mxu0 %v991
          %v1062 = vpop.f32.mrf.mxu0
          %v1063 = vadd.f32 0.0, %v1062
          %v1064 = vpop.f32.mrf.mxu0
          %1065 = vmatprep.mubr.f32.mxu0 0.0
          %1066 = vmatmul.mubr.f32.gmra.mxu0 %v994
          %v1067 = vpop.f32.mrf.mxu0
          %v1068 = vadd.f32 0.0, %v1067
          %v1069 = vpop.f32.mrf.mxu0
          %1070 = vdwg.mxu0
          %v1071 = vxor.u32 %v1063, 2147483648
          %v1072 = vxor.u32 %v1068, 2147483648
          %v1073 = vmul.f32 %v1071, 1.442695
          %v1074 = vpow.pop %v1073
          %v1075 = vmul.f32 %v1072, 1.442695
          %v1076 = vpow.pop %v1075
          %v1077 = vadd.f32 %v1074, 1.0
          %v1078 = vadd.f32 %v1076, 1.0
          %v1079 = vrcp.pop %v1077
          %v1080 = vmul.f32 1.0, %v1079
          %v1081 = vrcp.pop %v1078
          %v1082 = vmul.f32 1.0, %v1081
          %v1083 = vmul.f32 %v1063, %v1080
          %v1084 = vmul.f32 %v1068, %v1082
          %v1085 = vld [vmem:[%s4 + $0x90] sm:$0xff]
          %v1086 = vld [vmem:[%s4 + $0x98] sm:$0xff]
          %v1088 = vsel %vm989, %v1083, 0
          %v1091 = vsel %vm989, %v1084, 0
          %1093 = vmatprep.subr.mxu0 0.0
          %1094 = vmatpush1.msra.mxu0 0.0
          %1095 = vmatprep.subr.mxu0 0.0
          %1096 = vmatpush1.msra.mxu0 0.0
          %1097 = vmatprep.subr.mxu0 0.0
          %1098 = vmatpush1.msra.mxu0 0.0
          %1099 = vmatprep.subr.mxu0 0.0
          %1100 = vmatpush1.msra.mxu0 0.0
          %1101 = vmatprep.subr.mxu0 0.0
          %1102 = vmatpush1.msra.mxu0 0.0
          %1103 = vmatprep.subr.mxu0 0.0
          %1104 = vmatpush1.msra.mxu0 0.0
          %1105 = vmatprep.subr.mxu0 0.0
          %1106 = vmatpush1.msra.mxu0 0.0
          %1107 = vmatprep.subr.mxu0 0.0
          %1108 = vmatpush1.msra.mxu0 0.0
          %1109 = vmatprep.subr.mxu0 0.0
          %1110 = vmatpush1.msra.mxu0 0.0
          %1111 = vmatprep.subr.mxu0 0.0
          %1112 = vmatpush1.msra.mxu0 0.0
          %1113 = vmatprep.subr.mxu0 0.0
          %1114 = vmatpush1.msra.mxu0 0.0
          %1115 = vmatprep.subr.mxu0 0.0
          %1116 = vmatpush1.msra.mxu0 0.0
          %1117 = vmatprep.subr.mxu0 0.0
          %1118 = vmatpush1.msra.mxu0 0.0
          %1119 = vmatprep.subr.mxu0 0.0
          %1120 = vmatpush1.msra.mxu0 0.0
          %1121 = vmatprep.subr.mxu0 0.0
          %1122 = vmatpush1.msra.mxu0 %v1086
          %1123 = vmatprep.subr.mxu0 0.0
          %1124 = vmatpush1.msra.mxu0 %v1085
          %1125 = vmatprep.subr.mxu0 0.0
          %1126 = vmatpush2.msra.mxu0 0.0
          %1127 = vmatprep.subr.mxu0 0.0
          %1128 = vmatpush2.msra.mxu0 0.0
          %1129 = vmatprep.subr.mxu0 0.0
          %1130 = vmatpush2.msra.mxu0 0.0
          %1131 = vmatprep.subr.mxu0 0.0
          %1132 = vmatpush2.msra.mxu0 0.0
          %1133 = vmatprep.subr.mxu0 0.0
          %1134 = vmatpush2.msra.mxu0 0.0
          %1135 = vmatprep.subr.mxu0 0.0
          %1136 = vmatpush2.msra.mxu0 0.0
          %1137 = vmatprep.subr.mxu0 0.0
          %1138 = vmatpush2.msra.mxu0 0.0
          %1139 = vmatprep.subr.mxu0 0.0
          %1140 = vmatpush2.msra.mxu0 0.0
          %1141 = vmatprep.subr.mxu0 0.0
          %1142 = vmatpush2.msra.mxu0 0.0
          %1143 = vmatprep.subr.mxu0 0.0
          %1144 = vmatpush2.msra.mxu0 0.0
          %1145 = vmatprep.subr.mxu0 0.0
          %1146 = vmatpush2.msra.mxu0 0.0
          %1147 = vmatprep.subr.mxu0 0.0
          %1148 = vmatpush2.msra.mxu0 0.0
          %1149 = vmatprep.subr.mxu0 0.0
          %1150 = vmatpush2.msra.mxu0 0.0
          %1151 = vmatprep.subr.mxu0 0.0
          %1152 = vmatpush2.msra.mxu0 0.0
          %1153 = vmatprep.subr.mxu0 0.0
          %1154 = vmatpush2.msra.mxu0 0.0
          %1155 = vmatprep.subr.mxu0 0.0
          %1156 = vmatpush2.msra.mxu0 0.0
          %1157 = vmatprep.mubr.f32.mxu0 0.0
          %1158 = vmatmul.mubr.f32.gmra.mxu0 %v1088
          %v1159 = vpop.f32.mrf.mxu0
          %v1160 = vadd.f32 0.0, %v1159
          %v1161 = vpop.f32.mrf.mxu0
          %1162 = vmatprep.mubr.f32.mxu0 0.0
          %1163 = vmatmul.mubr.f32.gmra.mxu0 %v1091
          %v1164 = vpop.f32.mrf.mxu0
          %v1165 = vadd.f32 0.0, %v1164
          %v1166 = vpop.f32.mrf.mxu0
          %1167 = vdwg.mxu0
          %v1168 = vld [vmem:[#allocation7] sm:$0xff]
          %v1169 = vld [vmem:[#allocation7 + $0x8] sm:$0xff]
          %1171 = vset.pattern.permute.xlu0 1
          %1172 = vperm.xlu0 %1171, %v611
          %v1173 = vpop.permute.xlu0 %1172
          %1176 = vset.pattern.permute.xlu0 1
          %1177 = vperm.xlu0 %1176, %v612
          %v1178 = vpop.permute.xlu0 %1177
          %v1180 = vmul.f32 %v1168, %v1173
          %v1181 = vmul.f32 %v1169, %v1178
          %1182 = vset.pattern.permute.xlu0 2
          %1183 = vperm.xlu0 %1182, %v611
          %v1184 = vpop.permute.xlu0 %1183
          %1186 = vset.pattern.permute.xlu0 2
          %1187 = vperm.xlu0 %1186, %v612
          %v1188 = vpop.permute.xlu0 %1187
          %v1190 = vmul.f32 %v1168, %v1184
          %v1191 = vmul.f32 %v1169, %v1188
          %1192 = vset.pattern.permute.xlu0 0
          %1193 = vperm.xlu0 %1192, %v611
          %v1194 = vpop.permute.xlu0 %1193
          %1196 = vset.pattern.permute.xlu0 0
          %1197 = vperm.xlu0 %1196, %v612
          %v1198 = vpop.permute.xlu0 %1197
          %v1200 = vmul.f32 %v1168, %v1194
          %v1201 = vmul.f32 %v1169, %v1198
          %1204 = vrot.lane.b32.xlu0 %v1180, 16
          %v1205 = vpop.permute.xlu0 %1204
          %1206 = vrot.lane.b32.xlu0 %v1181, 16
          %v1207 = vpop.permute.xlu0 %1206
          %1212 = vrot.lane.b32.xlu0 %v1190, 32
          %v1213 = vpop.permute.xlu0 %1212
          %1214 = vrot.lane.b32.xlu0 %v1191, 32
          %v1215 = vpop.permute.xlu0 %1214
          %1220 = vrot.lane.b32.xlu0 %v1200, 48
          %v1221 = vpop.permute.xlu0 %1220
          %1222 = vrot.lane.b32.xlu0 %v1201, 48
          %v1223 = vpop.permute.xlu0 %1222
          %v1226 = vsel %vm989, %v1168, %v1205
          %v1227 = vsel %vm989, %v1169, %v1207
          %vm1228 = vcmask 261120
          %v1229 = vsel %vm1228, %v1226, %v1213
          %v1230 = vsel %vm1228, %v1227, %v1215
          %vm1231 = vcmask 392192
          %v1232 = vsel %vm1231, %v1229, %v1221
          %v1233 = vsel %vm1231, %v1230, %v1223
          %v1234 = vmul.f32 %v1160, %v1232
          %v1235 = vmul.f32 %v1165, %v1233
          %v1236 = vld [vmem:[%s4 + $0xa0] sm:$0xff]
          %v1237 = vld [vmem:[%s4 + $0xa8] sm:$0xff]
          %v1238 = vld [vmem:[%s4 + $0xb0] sm:$0xff]
          %v1239 = vld [vmem:[%s4 + $0xb8] sm:$0xff]
          %v1240 = vld [vmem:[%s4 + $0xc0] sm:$0xff]
          %v1241 = vld [vmem:[%s4 + $0xc8] sm:$0xff]
          %v1242 = vld [vmem:[%s4 + $0xd0] sm:$0xff]
          %v1243 = vld [vmem:[%s4 + $0xd8] sm:$0xff]
          %vm1244 = vcmask 523264
          %v1246 = vsel %vm1244, %v1234, 0
          %v1249 = vsel %vm1244, %v1235, 0
          %1251 = vmatprep.subr.mxu0 0.0
          %1252 = vmatpush1.msra.mxu0 0.0
          %1253 = vmatprep.subr.mxu0 0.0
          %1254 = vmatpush1.msra.mxu0 0.0
          %1255 = vmatprep.subr.mxu0 0.0
          %1256 = vmatpush1.msra.mxu0 0.0
          %1257 = vmatprep.subr.mxu0 0.0
          %1258 = vmatpush1.msra.mxu0 0.0
          %1259 = vmatprep.subr.mxu0 0.0
          %1260 = vmatpush1.msra.mxu0 0.0
          %1261 = vmatprep.subr.mxu0 0.0
          %1262 = vmatpush1.msra.mxu0 0.0
          %1263 = vmatprep.subr.mxu0 0.0
          %1264 = vmatpush1.msra.mxu0 0.0
          %1265 = vmatprep.subr.mxu0 0.0
          %1266 = vmatpush1.msra.mxu0 0.0
          %1267 = vmatprep.subr.mxu0 0.0
          %1268 = vmatpush1.msra.mxu0 %v1243
          %1269 = vmatprep.subr.mxu0 0.0
          %1270 = vmatpush1.msra.mxu0 %v1242
          %1271 = vmatprep.subr.mxu0 0.0
          %1272 = vmatpush1.msra.mxu0 %v1241
          %1273 = vmatprep.subr.mxu0 0.0
          %1274 = vmatpush1.msra.mxu0 %v1240
          %1275 = vmatprep.subr.mxu0 0.0
          %1276 = vmatpush1.msra.mxu0 %v1239
          %1277 = vmatprep.subr.mxu0 0.0
          %1278 = vmatpush1.msra.mxu0 %v1238
          %1279 = vmatprep.subr.mxu0 0.0
          %1280 = vmatpush1.msra.mxu0 %v1237
          %1281 = vmatprep.subr.mxu0 0.0
          %1282 = vmatpush1.msra.mxu0 %v1236
          %1283 = vmatprep.subr.mxu0 0.0
          %1284 = vmatpush2.msra.mxu0 0.0
          %1285 = vmatprep.subr.mxu0 0.0
          %1286 = vmatpush2.msra.mxu0 0.0
          %1287 = vmatprep.subr.mxu0 0.0
          %1288 = vmatpush2.msra.mxu0 0.0
          %1289 = vmatprep.subr.mxu0 0.0
          %1290 = vmatpush2.msra.mxu0 0.0
          %1291 = vmatprep.subr.mxu0 0.0
          %1292 = vmatpush2.msra.mxu0 0.0
          %1293 = vmatprep.subr.mxu0 0.0
          %1294 = vmatpush2.msra.mxu0 0.0
          %1295 = vmatprep.subr.mxu0 0.0
          %1296 = vmatpush2.msra.mxu0 0.0
          %1297 = vmatprep.subr.mxu0 0.0
          %1298 = vmatpush2.msra.mxu0 0.0
          %1299 = vmatprep.subr.mxu0 0.0
          %1300 = vmatpush2.msra.mxu0 0.0
          %1301 = vmatprep.subr.mxu0 0.0
          %1302 = vmatpush2.msra.mxu0 0.0
          %1303 = vmatprep.subr.mxu0 0.0
          %1304 = vmatpush2.msra.mxu0 0.0
          %1305 = vmatprep.subr.mxu0 0.0
          %1306 = vmatpush2.msra.mxu0 0.0
          %1307 = vmatprep.subr.mxu0 0.0
          %1308 = vmatpush2.msra.mxu0 0.0
          %1309 = vmatprep.subr.mxu0 0.0
          %1310 = vmatpush2.msra.mxu0 0.0
          %1311 = vmatprep.subr.mxu0 0.0
          %1312 = vmatpush2.msra.mxu0 0.0
          %1313 = vmatprep.subr.mxu0 0.0
          %1314 = vmatpush2.msra.mxu0 0.0
          %1315 = vmatprep.mubr.f32.mxu0 0.0
          %1316 = vmatmul.mubr.f32.gmra.mxu0 %v1246
          %v1317 = vpop.f32.mrf.mxu0
          %v1318 = vadd.f32 0.0, %v1317
          %v1319 = vpop.f32.mrf.mxu0
          %1320 = vmatprep.mubr.f32.mxu0 0.0
          %1321 = vmatmul.mubr.f32.gmra.mxu0 %v1249
          %v1322 = vpop.f32.mrf.mxu0
          %v1323 = vadd.f32 0.0, %v1322
          %v1324 = vpop.f32.mrf.mxu0
          %1325 = vdwg.mxu0
          %v1326 = vmul.f32 %v1318, %v872
          %v1327 = vmul.f32 %v1323, %v873
          %vm1328 = vcmask 326656
          %1329 = vst.msk [vmem:[#allocation8] sm:$0xff] %vm1328, %v1326
          %1330 = vst.msk [vmem:[#allocation8 + $0x8] sm:$0xff] %vm1328, %v1327
        $region51: #{hdnnp_forward.1} parent=31 // pred_fallthru
          _
        // Predicated region
        $region52: #{hdnnp_forward.1} parent=31 // pred_check
          %p1331 = pneg %p356
        $region53: #{hdnnp_forward.1} parent=31 // pred_check_branch
          %1333 = sbr.rel (%p1331) target = $region55
        $region54: #{hdnnp_forward.1} parent=31 // pred_region
          %v1334 = vld [vmem:[%s4 + $0xe0] sm:$0xff]
          %vm1335 = vcmask 64512
          %v1337 = vsel %vm1335, %v860, 0
          %v1340 = vsel %vm1335, %v861, 0
          %1342 = vmatprep.subr.mxu0 0.0
          %1343 = vmatpush1.msra.mxu0 0.0
          %1344 = vmatprep.subr.mxu0 0.0
          %1345 = vmatpush1.msra.mxu0 0.0
          %1346 = vmatprep.subr.mxu0 0.0
          %1347 = vmatpush1.msra.mxu0 0.0
          %1348 = vmatprep.subr.mxu0 0.0
          %1349 = vmatpush1.msra.mxu0 0.0
          %1350 = vmatprep.subr.mxu0 0.0
          %1351 = vmatpush1.msra.mxu0 0.0
          %1352 = vmatprep.subr.mxu0 0.0
          %1353 = vmatpush1.msra.mxu0 0.0
          %1354 = vmatprep.subr.mxu0 0.0
          %1355 = vmatpush1.msra.mxu0 0.0
          %1356 = vmatprep.subr.mxu0 0.0
          %1357 = vmatpush1.msra.mxu0 0.0
          %1358 = vmatprep.subr.mxu0 0.0
          %1359 = vmatpush1.msra.mxu0 0.0
          %1360 = vmatprep.subr.mxu0 0.0
          %1361 = vmatpush1.msra.mxu0 0.0
          %1362 = vmatprep.subr.mxu0 0.0
          %1363 = vmatpush1.msra.mxu0 0.0
          %1364 = vmatprep.subr.mxu0 0.0
          %1365 = vmatpush1.msra.mxu0 0.0
          %1366 = vmatprep.subr.mxu0 0.0
          %1367 = vmatpush1.msra.mxu0 0.0
          %1368 = vmatprep.subr.mxu0 0.0
          %1369 = vmatpush1.msra.mxu0 0.0
          %1370 = vmatprep.subr.mxu0 0.0
          %1371 = vmatpush1.msra.mxu0 0.0
          %1372 = vmatprep.subr.mxu0 0.0
          %1373 = vmatpush1.msra.mxu0 %v1334
          %1374 = vmatprep.subr.mxu0 0.0
          %1375 = vmatpush2.msra.mxu0 0.0
          %1376 = vmatprep.subr.mxu0 0.0
          %1377 = vmatpush2.msra.mxu0 0.0
          %1378 = vmatprep.subr.mxu0 0.0
          %1379 = vmatpush2.msra.mxu0 0.0
          %1380 = vmatprep.subr.mxu0 0.0
          %1381 = vmatpush2.msra.mxu0 0.0
          %1382 = vmatprep.subr.mxu0 0.0
          %1383 = vmatpush2.msra.mxu0 0.0
          %1384 = vmatprep.subr.mxu0 0.0
          %1385 = vmatpush2.msra.mxu0 0.0
          %1386 = vmatprep.subr.mxu0 0.0
          %1387 = vmatpush2.msra.mxu0 0.0
          %1388 = vmatprep.subr.mxu0 0.0
          %1389 = vmatpush2.msra.mxu0 0.0
          %1390 = vmatprep.subr.mxu0 0.0
          %1391 = vmatpush2.msra.mxu0 0.0
          %1392 = vmatprep.subr.mxu0 0.0
          %1393 = vmatpush2.msra.mxu0 0.0
          %1394 = vmatprep.subr.mxu0 0.0
          %1395 = vmatpush2.msra.mxu0 0.0
          %1396 = vmatprep.subr.mxu0 0.0
          %1397 = vmatpush2.msra.mxu0 0.0
          %1398 = vmatprep.subr.mxu0 0.0
          %1399 = vmatpush2.msra.mxu0 0.0
          %1400 = vmatprep.subr.mxu0 0.0
          %1401 = vmatpush2.msra.mxu0 0.0
          %1402 = vmatprep.subr.mxu0 0.0
          %1403 = vmatpush2.msra.mxu0 0.0
          %1404 = vmatprep.subr.mxu0 0.0
          %1405 = vmatpush2.msra.mxu0 0.0
          %1406 = vmatprep.mubr.f32.mxu0 0.0
          %1407 = vmatmul.mubr.f32.gmra.mxu0 %v1337
          %v1408 = vpop.f32.mrf.mxu0
          %v1409 = vadd.f32 0.0, %v1408
          %v1410 = vpop.f32.mrf.mxu0
          %1411 = vmatprep.mubr.f32.mxu0 0.0
          %1412 = vmatmul.mubr.f32.gmra.mxu0 %v1340
          %v1413 = vpop.f32.mrf.mxu0
          %v1414 = vadd.f32 0.0, %v1413
          %v1415 = vpop.f32.mrf.mxu0
          %1416 = vdwg.mxu0
          %v1417 = vxor.u32 %v1409, 2147483648
          %v1418 = vxor.u32 %v1414, 2147483648
          %v1419 = vmul.f32 %v1417, 1.442695
          %v1420 = vpow.pop %v1419
          %v1421 = vmul.f32 %v1418, 1.442695
          %v1422 = vpow.pop %v1421
          %v1423 = vadd.f32 %v1420, 1.0
          %v1424 = vadd.f32 %v1422, 1.0
          %v1425 = vrcp.pop %v1423
          %v1426 = vmul.f32 1.0, %v1425
          %v1427 = vrcp.pop %v1424
          %v1428 = vmul.f32 1.0, %v1427
          %v1429 = vmul.f32 %v1409, %v1426
          %v1430 = vmul.f32 %v1414, %v1428
          %v1431 = vld [vmem:[%s4 + $0xe8] sm:$0xff]
          %v1432 = vld [vmem:[%s4 + $0xf0] sm:$0xff]
          %vm1433 = vcmask 130048
          %v1435 = vsel %vm1433, %v1429, 0
          %v1438 = vsel %vm1433, %v1430, 0
          %1440 = vmatprep.subr.mxu0 0.0
          %1441 = vmatpush1.msra.mxu0 0.0
          %1442 = vmatprep.subr.mxu0 0.0
          %1443 = vmatpush1.msra.mxu0 0.0
          %1444 = vmatprep.subr.mxu0 0.0
          %1445 = vmatpush1.msra.mxu0 0.0
          %1446 = vmatprep.subr.mxu0 0.0
          %1447 = vmatpush1.msra.mxu0 0.0
          %1448 = vmatprep.subr.mxu0 0.0
          %1449 = vmatpush1.msra.mxu0 0.0
          %1450 = vmatprep.subr.mxu0 0.0
          %1451 = vmatpush1.msra.mxu0 0.0
          %1452 = vmatprep.subr.mxu0 0.0
          %1453 = vmatpush1.msra.mxu0 0.0
          %1454 = vmatprep.subr.mxu0 0.0
          %1455 = vmatpush1.msra.mxu0 0.0
          %1456 = vmatprep.subr.mxu0 0.0
          %1457 = vmatpush1.msra.mxu0 0.0
          %1458 = vmatprep.subr.mxu0 0.0
          %1459 = vmatpush1.msra.mxu0 0.0
          %1460 = vmatprep.subr.mxu0 0.0
          %1461 = vmatpush1.msra.mxu0 0.0
          %1462 = vmatprep.subr.mxu0 0.0
          %1463 = vmatpush1.msra.mxu0 0.0
          %1464 = vmatprep.subr.mxu0 0.0
          %1465 = vmatpush1.msra.mxu0 0.0
          %1466 = vmatprep.subr.mxu0 0.0
          %1467 = vmatpush1.msra.mxu0 0.0
          %1468 = vmatprep.subr.mxu0 0.0
          %1469 = vmatpush1.msra.mxu0 %v1432
          %1470 = vmatprep.subr.mxu0 0.0
          %1471 = vmatpush1.msra.mxu0 %v1431
          %1472 = vmatprep.subr.mxu0 0.0
          %1473 = vmatpush2.msra.mxu0 0.0
          %1474 = vmatprep.subr.mxu0 0.0
          %1475 = vmatpush2.msra.mxu0 0.0
          %1476 = vmatprep.subr.mxu0 0.0
          %1477 = vmatpush2.msra.mxu0 0.0
          %1478 = vmatprep.subr.mxu0 0.0
          %1479 = vmatpush2.msra.mxu0 0.0
          %1480 = vmatprep.subr.mxu0 0.0
          %1481 = vmatpush2.msra.mxu0 0.0
          %1482 = vmatprep.subr.mxu0 0.0
          %1483 = vmatpush2.msra.mxu0 0.0
          %1484 = vmatprep.subr.mxu0 0.0
          %1485 = vmatpush2.msra.mxu0 0.0
          %1486 = vmatprep.subr.mxu0 0.0
          %1487 = vmatpush2.msra.mxu0 0.0
          %1488 = vmatprep.subr.mxu0 0.0
          %1489 = vmatpush2.msra.mxu0 0.0
          %1490 = vmatprep.subr.mxu0 0.0
          %1491 = vmatpush2.msra.mxu0 0.0
          %1492 = vmatprep.subr.mxu0 0.0
          %1493 = vmatpush2.msra.mxu0 0.0
          %1494 = vmatprep.subr.mxu0 0.0
          %1495 = vmatpush2.msra.mxu0 0.0
          %1496 = vmatprep.subr.mxu0 0.0
          %1497 = vmatpush2.msra.mxu0 0.0
          %1498 = vmatprep.subr.mxu0 0.0
          %1499 = vmatpush2.msra.mxu0 0.0
          %1500 = vmatprep.subr.mxu0 0.0
          %1501 = vmatpush2.msra.mxu0 0.0
          %1502 = vmatprep.subr.mxu0 0.0
          %1503 = vmatpush2.msra.mxu0 0.0
          %1504 = vmatprep.mubr.f32.mxu0 0.0
          %1505 = vmatmul.mubr.f32.gmra.mxu0 %v1435
          %v1506 = vpop.f32.mrf.mxu0
          %v1507 = vadd.f32 0.0, %v1506
          %v1508 = vpop.f32.mrf.mxu0
          %1509 = vmatprep.mubr.f32.mxu0 0.0
          %1510 = vmatmul.mubr.f32.gmra.mxu0 %v1438
          %v1511 = vpop.f32.mrf.mxu0
          %v1512 = vadd.f32 0.0, %v1511
          %v1513 = vpop.f32.mrf.mxu0
          %1514 = vdwg.mxu0
          %v1515 = vxor.u32 %v1507, 2147483648
          %v1516 = vxor.u32 %v1512, 2147483648
          %v1517 = vmul.f32 %v1515, 1.442695
          %v1518 = vpow.pop %v1517
          %v1519 = vmul.f32 %v1516, 1.442695
          %v1520 = vpow.pop %v1519
          %v1521 = vadd.f32 %v1518, 1.0
          %v1522 = vadd.f32 %v1520, 1.0
          %v1523 = vrcp.pop %v1521
          %v1524 = vmul.f32 1.0, %v1523
          %v1525 = vrcp.pop %v1522
          %v1526 = vmul.f32 1.0, %v1525
          %v1527 = vmul.f32 %v1507, %v1524
          %v1528 = vmul.f32 %v1512, %v1526
          %v1529 = vld [vmem:[%s4 + $0xf8] sm:$0xff]
          %v1530 = vld [vmem:[%s4 + $0x100] sm:$0xff]
          %v1532 = vsel %vm1433, %v1527, 0
          %v1535 = vsel %vm1433, %v1528, 0
          %1537 = vmatprep.subr.mxu0 0.0
          %1538 = vmatpush1.msra.mxu0 0.0
          %1539 = vmatprep.subr.mxu0 0.0
          %1540 = vmatpush1.msra.mxu0 0.0
          %1541 = vmatprep.subr.mxu0 0.0
          %1542 = vmatpush1.msra.mxu0 0.0
          %1543 = vmatprep.subr.mxu0 0.0
          %1544 = vmatpush1.msra.mxu0 0.0
          %1545 = vmatprep.subr.mxu0 0.0
          %1546 = vmatpush1.msra.mxu0 0.0
          %1547 = vmatprep.subr.mxu0 0.0
          %1548 = vmatpush1.msra.mxu0 0.0
          %1549 = vmatprep.subr.mxu0 0.0
          %1550 = vmatpush1.msra.mxu0 0.0
          %1551 = vmatprep.subr.mxu0 0.0
          %1552 = vmatpush1.msra.mxu0 0.0
          %1553 = vmatprep.subr.mxu0 0.0
          %1554 = vmatpush1.msra.mxu0 0.0
          %1555 = vmatprep.subr.mxu0 0.0
          %1556 = vmatpush1.msra.mxu0 0.0
          %1557 = vmatprep.subr.mxu0 0.0
          %1558 = vmatpush1.msra.mxu0 0.0
          %1559 = vmatprep.subr.mxu0 0.0
          %1560 = vmatpush1.msra.mxu0 0.0
          %1561 = vmatprep.subr.mxu0 0.0
          %1562 = vmatpush1.msra.mxu0 0.0
          %1563 = vmatprep.subr.mxu0 0.0
          %1564 = vmatpush1.msra.mxu0 0.0
          %1565 = vmatprep.subr.mxu0 0.0
          %1566 = vmatpush1.msra.mxu0 %v1530
          %1567 = vmatprep.subr.mxu0 0.0
          %1568 = vmatpush1.msra.mxu0 %v1529
          %1569 = vmatprep.subr.mxu0 0.0
          %1570 = vmatpush2.msra.mxu0 0.0
          %1571 = vmatprep.subr.mxu0 0.0
          %1572 = vmatpush2.msra.mxu0 0.0
          %1573 = vmatprep.subr.mxu0 0.0
          %1574 = vmatpush2.msra.mxu0 0.0
          %1575 = vmatprep.subr.mxu0 0.0
          %1576 = vmatpush2.msra.mxu0 0.0
          %1577 = vmatprep.subr.mxu0 0.0
          %1578 = vmatpush2.msra.mxu0 0.0
          %1579 = vmatprep.subr.mxu0 0.0
          %1580 = vmatpush2.msra.mxu0 0.0
          %1581 = vmatprep.subr.mxu0 0.0
          %1582 = vmatpush2.msra.mxu0 0.0
          %1583 = vmatprep.subr.mxu0 0.0
          %1584 = vmatpush2.msra.mxu0 0.0
          %1585 = vmatprep.subr.mxu0 0.0
          %1586 = vmatpush2.msra.mxu0 0.0
          %1587 = vmatprep.subr.mxu0 0.0
          %1588 = vmatpush2.msra.mxu0 0.0
          %1589 = vmatprep.subr.mxu0 0.0
          %1590 = vmatpush2.msra.mxu0 0.0
          %1591 = vmatprep.subr.mxu0 0.0
          %1592 = vmatpush2.msra.mxu0 0.0
          %1593 = vmatprep.subr.mxu0 0.0
          %1594 = vmatpush2.msra.mxu0 0.0
          %1595 = vmatprep.subr.mxu0 0.0
          %1596 = vmatpush2.msra.mxu0 0.0
          %1597 = vmatprep.subr.mxu0 0.0
          %1598 = vmatpush2.msra.mxu0 0.0
          %1599 = vmatprep.subr.mxu0 0.0
          %1600 = vmatpush2.msra.mxu0 0.0
          %1601 = vmatprep.mubr.f32.mxu0 0.0
          %1602 = vmatmul.mubr.f32.gmra.mxu0 %v1532
          %v1603 = vpop.f32.mrf.mxu0
          %v1604 = vadd.f32 0.0, %v1603
          %v1605 = vpop.f32.mrf.mxu0
          %1606 = vmatprep.mubr.f32.mxu0 0.0
          %1607 = vmatmul.mubr.f32.gmra.mxu0 %v1535
          %v1608 = vpop.f32.mrf.mxu0
          %v1609 = vadd.f32 0.0, %v1608
          %v1610 = vpop.f32.mrf.mxu0
          %1611 = vdwg.mxu0
          %v1612 = vld [vmem:[#allocation7] sm:$0xff]
          %v1613 = vld [vmem:[#allocation7 + $0x8] sm:$0xff]
          %1615 = vset.pattern.permute.xlu0 1
          %1616 = vperm.xlu0 %1615, %v611
          %v1617 = vpop.permute.xlu0 %1616
          %1620 = vset.pattern.permute.xlu0 1
          %1621 = vperm.xlu0 %1620, %v612
          %v1622 = vpop.permute.xlu0 %1621
          %1624 = vset.pattern.permute.xlu0 2
          %1625 = vperm.xlu0 %1624, %v611
          %v1626 = vpop.permute.xlu0 %1625
          %1628 = vset.pattern.permute.xlu0 2
          %1629 = vperm.xlu0 %1628, %v612
          %v1630 = vpop.permute.xlu0 %1629
          %1632 = vset.pattern.permute.xlu0 0
          %1633 = vperm.xlu0 %1632, %v611
          %v1634 = vpop.permute.xlu0 %1633
          %1636 = vset.pattern.permute.xlu0 0
          %1637 = vperm.xlu0 %1636, %v612
          %v1638 = vpop.permute.xlu0 %1637
          %v1640 = vsel %vm1335, 1.0, %v1617
          %v1641 = vsel %vm1335, 1.0, %v1622
          %v1642 = vsel %vm1433, %v1640, %v1626
          %v1643 = vsel %vm1433, %v1641, %v1630
          %vm1644 = vcmask 195584
          %v1645 = vsel %vm1644, %v1642, %v1634
          %v1646 = vsel %vm1644, %v1643, %v1638
          %v1647 = vmul.f32 %v1604, %v1612
          %v1648 = vmul.f32 %v1609, %v1613
          %v1649 = vmul.f32 %v1647, %v1645
          %v1650 = vmul.f32 %v1648, %v1646
          %v1651 = vld [vmem:[%s4 + $0x108] sm:$0xff]
          %v1652 = vld [vmem:[%s4 + $0x110] sm:$0xff]
          %v1653 = vld [vmem:[%s4 + $0x118] sm:$0xff]
          %v1654 = vld [vmem:[%s4 + $0x120] sm:$0xff]
          %vm1655 = vcmask 261120
          %v1657 = vsel %vm1655, %v1649, 0
          %v1660 = vsel %vm1655, %v1650, 0
          %1662 = vmatprep.subr.mxu0 0.0
          %1663 = vmatpush1.msra.mxu0 0.0
          %1664 = vmatprep.subr.mxu0 0.0
          %1665 = vmatpush1.msra.mxu0 0.0
          %1666 = vmatprep.subr.mxu0 0.0
          %1667 = vmatpush1.msra.mxu0 0.0
          %1668 = vmatprep.subr.mxu0 0.0
          %1669 = vmatpush1.msra.mxu0 0.0
          %1670 = vmatprep.subr.mxu0 0.0
          %1671 = vmatpush1.msra.mxu0 0.0
          %1672 = vmatprep.subr.mxu0 0.0
          %1673 = vmatpush1.msra.mxu0 0.0
          %1674 = vmatprep.subr.mxu0 0.0
          %1675 = vmatpush1.msra.mxu0 0.0
          %1676 = vmatprep.subr.mxu0 0.0
          %1677 = vmatpush1.msra.mxu0 0.0
          %1678 = vmatprep.subr.mxu0 0.0
          %1679 = vmatpush1.msra.mxu0 0.0
          %1680 = vmatprep.subr.mxu0 0.0
          %1681 = vmatpush1.msra.mxu0 0.0
          %1682 = vmatprep.subr.mxu0 0.0
          %1683 = vmatpush1.msra.mxu0 0.0
          %1684 = vmatprep.subr.mxu0 0.0
          %1685 = vmatpush1.msra.mxu0 0.0
          %1686 = vmatprep.subr.mxu0 0.0
          %1687 = vmatpush1.msra.mxu0 %v1654
          %1688 = vmatprep.subr.mxu0 0.0
          %1689 = vmatpush1.msra.mxu0 %v1653
          %1690 = vmatprep.subr.mxu0 0.0
          %1691 = vmatpush1.msra.mxu0 %v1652
          %1692 = vmatprep.subr.mxu0 0.0
          %1693 = vmatpush1.msra.mxu0 %v1651
          %1694 = vmatprep.subr.mxu0 0.0
          %1695 = vmatpush2.msra.mxu0 0.0
          %1696 = vmatprep.subr.mxu0 0.0
          %1697 = vmatpush2.msra.mxu0 0.0
          %1698 = vmatprep.subr.mxu0 0.0
          %1699 = vmatpush2.msra.mxu0 0.0
          %1700 = vmatprep.subr.mxu0 0.0
          %1701 = vmatpush2.msra.mxu0 0.0
          %1702 = vmatprep.subr.mxu0 0.0
          %1703 = vmatpush2.msra.mxu0 0.0
          %1704 = vmatprep.subr.mxu0 0.0
          %1705 = vmatpush2.msra.mxu0 0.0
          %1706 = vmatprep.subr.mxu0 0.0
          %1707 = vmatpush2.msra.mxu0 0.0
          %1708 = vmatprep.subr.mxu0 0.0
          %1709 = vmatpush2.msra.mxu0 0.0
          %1710 = vmatprep.subr.mxu0 0.0
          %1711 = vmatpush2.msra.mxu0 0.0
          %1712 = vmatprep.subr.mxu0 0.0
          %1713 = vmatpush2.msra.mxu0 0.0
          %1714 = vmatprep.subr.mxu0 0.0
          %1715 = vmatpush2.msra.mxu0 0.0
          %1716 = vmatprep.subr.mxu0 0.0
          %1717 = vmatpush2.msra.mxu0 0.0
          %1718 = vmatprep.subr.mxu0 0.0
          %1719 = vmatpush2.msra.mxu0 0.0
          %1720 = vmatprep.subr.mxu0 0.0
          %1721 = vmatpush2.msra.mxu0 0.0
          %1722 = vmatprep.subr.mxu0 0.0
          %1723 = vmatpush2.msra.mxu0 0.0
          %1724 = vmatprep.subr.mxu0 0.0
          %1725 = vmatpush2.msra.mxu0 0.0
          %1726 = vmatprep.mubr.f32.mxu0 0.0
          %1727 = vmatmul.mubr.f32.gmra.mxu0 %v1657
          %v1728 = vpop.f32.mrf.mxu0
          %v1729 = vadd.f32 0.0, %v1728
          %v1730 = vpop.f32.mrf.mxu0
          %1731 = vmatprep.mubr.f32.mxu0 0.0
          %1732 = vmatmul.mubr.f32.gmra.mxu0 %v1660
          %v1733 = vpop.f32.mrf.mxu0
          %v1734 = vadd.f32 0.0, %v1733
          %v1735 = vpop.f32.mrf.mxu0
          %1736 = vdwg.mxu0
          %v1737 = vmul.f32 %v1729, %v872
          %v1738 = vmul.f32 %v1734, %v873
          %v1739 = vsel %vm1433, %v1737, 0.0
          %v1740 = vsel %vm1433, %v1738, 0.0
          %vm1741 = vcmask 326656
          %1742 = vst.msk [vmem:[#allocation8] sm:$0xff] %vm1741, %v1739
          %1743 = vst.msk [vmem:[#allocation8 + $0x8] sm:$0xff] %vm1741, %v1740
        $region55: #{hdnnp_forward.1} parent=31 // pred_fallthru
          _
        loop: start=0, step=1, limit=16
        $region56: #{hdnnp_forward.1} parent=31 // loop_pre_header
          _
        $region57: #{hdnnp_forward.1} parent=31 // loop_header
          %s1745 = sphi 0, %s1749
          %p1746 = scmp.ge.s32.totalorder %s1745, 16
        $region58: #{hdnnp_forward.1} parent=31 // loop_header_branch
          %1748 = sbr.rel (%p1746) target = $region62
        $region59: #{hdnnp_forward.1} parent=31 // loop_body
          %s1750 = sadd.s32 %s591, %s1745
          %s1751 = sld [smem:[#allocation10 + %s1750]]
          %s1752 = scalar_lea.vmem [#allocation6], %s1751
          %v1753 = vld [vmem:[%s1752] sm:$0x1]
          %s1754 = scalar_lea.vmem [#allocation8], %s1745
          %v1755 = vld [vmem:[%s1754] sm:$0x1]
          %v1756 = vadd.f32 %v1753, %v1755
          %vm1757 = vcmask 319488
          %1758 = vst.msk [vmem:[%s1752] sm:$0x1] %vm1757, %v1756
        $region60: #{hdnnp_forward.1} parent=31 // loop_footer
          %s1749 = sadd.s32 1, %s1745
        $region61: #{hdnnp_forward.1} parent=31 // loop_footer_branch
          %1744 = sbr.rel target = $region57
        $region62: #{hdnnp_forward.1} parent=31 // loop_exit
          _
        // Predicated region
        $region63: #{hdnnp_forward.1} parent=31 // pred_check
          _
        $region64: #{hdnnp_forward.1} parent=31 // pred_check_branch
          %1760 = sbr.rel (%p357) target = $region66
        $region65: #{hdnnp_forward.1} parent=31 // pred_region
          %v1761 = vld [vmem:[#allocation6] sm:$0xff]
          %v1762 = vld [vmem:[%s4 + $0x38] sm:$0xff]
          %v1763 = vld [vmem:[%s4 + $0x40] sm:$0xff]
          %v1764 = vld [vmem:[#allocation4] sm:$0xff]
          %vm1765 = vcmask 130048
          %v1767 = vsel %vm1765, %v1761, 0
          %1769 = vmatprep.subr.mxu0 0.0
          %1770 = vmatpush1.msra.mxu0 0.0
          %1771 = vmatprep.subr.mxu0 0.0
          %1772 = vmatpush1.msra.mxu0 0.0
          %1773 = vmatprep.subr.mxu0 0.0
          %1774 = vmatpush1.msra.mxu0 0.0
          %1775 = vmatprep.subr.mxu0 0.0
          %1776 = vmatpush1.msra.mxu0 0.0
          %1777 = vmatprep.subr.mxu0 0.0
          %1778 = vmatpush1.msra.mxu0 0.0
          %1779 = vmatprep.subr.mxu0 0.0
          %1780 = vmatpush1.msra.mxu0 0.0
          %1781 = vmatprep.subr.mxu0 0.0
          %1782 = vmatpush1.msra.mxu0 0.0
          %1783 = vmatprep.subr.mxu0 0.0
          %1784 = vmatpush1.msra.mxu0 0.0
          %1785 = vmatprep.subr.mxu0 0.0
          %1786 = vmatpush1.msra.mxu0 0.0
          %1787 = vmatprep.subr.mxu0 0.0
          %1788 = vmatpush1.msra.mxu0 0.0
          %1789 = vmatprep.subr.mxu0 0.0
          %1790 = vmatpush1.msra.mxu0 0.0
          %1791 = vmatprep.subr.mxu0 0.0
          %1792 = vmatpush1.msra.mxu0 0.0
          %1793 = vmatprep.subr.mxu0 0.0
          %1794 = vmatpush1.msra.mxu0 0.0
          %1795 = vmatprep.subr.mxu0 0.0
          %1796 = vmatpush1.msra.mxu0 0.0
          %1797 = vmatprep.subr.mxu0 0.0
          %1798 = vmatpush1.msra.mxu0 %v1763
          %1799 = vmatprep.subr.mxu0 0.0
          %1800 = vmatpush1.msra.mxu0 %v1762
          %1801 = vmatprep.subr.mxu0 0.0
          %1802 = vmatpush2.msra.mxu0 0.0
          %1803 = vmatprep.subr.mxu0 0.0
          %1804 = vmatpush2.msra.mxu0 0.0
          %1805 = vmatprep.subr.mxu0 0.0
          %1806 = vmatpush2.msra.mxu0 0.0
          %1807 = vmatprep.subr.mxu0 0.0
          %1808 = vmatpush2.msra.mxu0 0.0
          %1809 = vmatprep.subr.mxu0 0.0
          %1810 = vmatpush2.msra.mxu0 0.0
          %1811 = vmatprep.subr.mxu0 0.0
          %1812 = vmatpush2.msra.mxu0 0.0
          %1813 = vmatprep.subr.mxu0 0.0
          %1814 = vmatpush2.msra.mxu0 0.0
          %1815 = vmatprep.subr.mxu0 0.0
          %1816 = vmatpush2.msra.mxu0 0.0
          %1817 = vmatprep.subr.mxu0 0.0
          %1818 = vmatpush2.msra.mxu0 0.0
          %1819 = vmatprep.subr.mxu0 0.0
          %1820 = vmatpush2.msra.mxu0 0.0
          %1821 = vmatprep.subr.mxu0 0.0
          %1822 = vmatpush2.msra.mxu0 0.0
          %1823 = vmatprep.subr.mxu0 0.0
          %1824 = vmatpush2.msra.mxu0 0.0
          %1825 = vmatprep.subr.mxu0 0.0
          %1826 = vmatpush2.msra.mxu0 0.0
          %1827 = vmatprep.subr.mxu0 0.0
          %1828 = vmatpush2.msra.mxu0 0.0
          %1829 = vmatprep.subr.mxu0 0.0
          %1830 = vmatpush2.msra.mxu0 0.0
          %1831 = vmatprep.subr.mxu0 0.0
          %1832 = vmatpush2.msra.mxu0 0.0
          %1833 = vmatprep.mubr.f32.mxu0 0.0
          %1834 = vmatmul.mubr.f32.gmra.mxu0 %v1767
          %v1835 = vpop.f32.mrf.mxu0
          %v1836 = vadd.f32 %v1764, %v1835
          %v1837 = vpop.f32.mrf.mxu0
          %1838 = vdwg.mxu0
          %v1839 = vmul.f32 %v1836, %v1836
          %v1840 = vsel %vm1765, %v1839, 0.0
          %1841 = vadd.xlane.f32.xlu0 %v1840
          %v1842 = vpop.xlane.xlu0 %1841
          %v1843 = vrcp.pop 16.0
          %v1844 = vmul.f32 %v1842, %v1843
          %v1845 = vadd.f32 %v1844, 1e-05
          %v1846 = vrsqrt.pop %v1845
          %v1847 = vmul.f32 %v1836, %v1846
          %v1848 = vld [vmem:[%s4 + $0x68] sm:$0x1]
          %v1849 = vlaneseq
          %v1850 = vshrl.u32 %v1849, 7
          %v1851 = vsub.s32 0, %v1850
          %v1852 = vrot.slane %v1848, %v1851
          %v1853 = vmul.f32 %v1847, %v1852
          %v1854 = vld [vmem:[#allocation2] sm:$0xff]
          %v1855 = vxor.u32 %v1853, 2147483648
          %v1856 = vmul.f32 %v1855, 1.442695
          %v1857 = vpow.pop %v1856
          %v1858 = vadd.f32 %v1857, 1.0
          %v1859 = vrcp.pop %v1858
          %v1860 = vmul.f32 1.0, %v1859
          %v1861 = vmul.f32 %v1853, %v1860
          %v1862 = vadd.f32 %v1854, %v1861
          %v1863 = vld [vmem:[%s4 + $0x48] sm:$0xff]
          %v1864 = vld [vmem:[%s4 + $0x50] sm:$0xff]
          %v1866 = vsel %vm1765, %v1862, 0
          %1868 = vmatprep.subr.mxu0 0.0
          %1869 = vmatpush1.msra.mxu0 0.0
          %1870 = vmatprep.subr.mxu0 0.0
          %1871 = vmatpush1.msra.mxu0 0.0
          %1872 = vmatprep.subr.mxu0 0.0
          %1873 = vmatpush1.msra.mxu0 0.0
          %1874 = vmatprep.subr.mxu0 0.0
          %1875 = vmatpush1.msra.mxu0 0.0
          %1876 = vmatprep.subr.mxu0 0.0
          %1877 = vmatpush1.msra.mxu0 0.0
          %1878 = vmatprep.subr.mxu0 0.0
          %1879 = vmatpush1.msra.mxu0 0.0
          %1880 = vmatprep.subr.mxu0 0.0
          %1881 = vmatpush1.msra.mxu0 0.0
          %1882 = vmatprep.subr.mxu0 0.0
          %1883 = vmatpush1.msra.mxu0 0.0
          %1884 = vmatprep.subr.mxu0 0.0
          %1885 = vmatpush1.msra.mxu0 0.0
          %1886 = vmatprep.subr.mxu0 0.0
          %1887 = vmatpush1.msra.mxu0 0.0
          %1888 = vmatprep.subr.mxu0 0.0
          %1889 = vmatpush1.msra.mxu0 0.0
          %1890 = vmatprep.subr.mxu0 0.0
          %1891 = vmatpush1.msra.mxu0 0.0
          %1892 = vmatprep.subr.mxu0 0.0
          %1893 = vmatpush1.msra.mxu0 0.0
          %1894 = vmatprep.subr.mxu0 0.0
          %1895 = vmatpush1.msra.mxu0 0.0
          %1896 = vmatprep.subr.mxu0 0.0
          %1897 = vmatpush1.msra.mxu0 %v1864
          %1898 = vmatprep.subr.mxu0 0.0
          %1899 = vmatpush1.msra.mxu0 %v1863
          %1900 = vmatprep.subr.mxu0 0.0
          %1901 = vmatpush2.msra.mxu0 0.0
          %1902 = vmatprep.subr.mxu0 0.0
          %1903 = vmatpush2.msra.mxu0 0.0
          %1904 = vmatprep.subr.mxu0 0.0
          %1905 = vmatpush2.msra.mxu0 0.0
          %1906 = vmatprep.subr.mxu0 0.0
          %1907 = vmatpush2.msra.mxu0 0.0
          %1908 = vmatprep.subr.mxu0 0.0
          %1909 = vmatpush2.msra.mxu0 0.0
          %1910 = vmatprep.subr.mxu0 0.0
          %1911 = vmatpush2.msra.mxu0 0.0
          %1912 = vmatprep.subr.mxu0 0.0
          %1913 = vmatpush2.msra.mxu0 0.0
          %1914 = vmatprep.subr.mxu0 0.0
          %1915 = vmatpush2.msra.mxu0 0.0
          %1916 = vmatprep.subr.mxu0 0.0
          %1917 = vmatpush2.msra.mxu0 0.0
          %1918 = vmatprep.subr.mxu0 0.0
          %1919 = vmatpush2.msra.mxu0 0.0
          %1920 = vmatprep.subr.mxu0 0.0
          %1921 = vmatpush2.msra.mxu0 0.0
          %1922 = vmatprep.subr.mxu0 0.0
          %1923 = vmatpush2.msra.mxu0 0.0
          %1924 = vmatprep.subr.mxu0 0.0
          %1925 = vmatpush2.msra.mxu0 0.0
          %1926 = vmatprep.subr.mxu0 0.0
          %1927 = vmatpush2.msra.mxu0 0.0
          %1928 = vmatprep.subr.mxu0 0.0
          %1929 = vmatpush2.msra.mxu0 0.0
          %1930 = vmatprep.subr.mxu0 0.0
          %1931 = vmatpush2.msra.mxu0 0.0
          %1932 = vmatprep.mubr.f32.mxu0 0.0
          %1933 = vmatmul.mubr.f32.gmra.mxu0 %v1866
          %v1934 = vpop.f32.mrf.mxu0
          %v1935 = vadd.f32 0.0, %v1934
          %v1936 = vpop.f32.mrf.mxu0
          %1937 = vdwg.mxu0
          %v1938 = vxor.u32 %v1935, 2147483648
          %v1939 = vmul.f32 %v1938, 1.442695
          %v1940 = vpow.pop %v1939
          %v1941 = vadd.f32 %v1940, 1.0
          %v1942 = vrcp.pop %v1941
          %v1943 = vmul.f32 1.0, %v1942
          %v1944 = vmul.f32 %v1935, %v1943
          %v1945 = vld [vmem:[%s4 + $0x70] sm:$0x1]
          %vm1946 = vcmask 64512
          %v1948 = vsel %vm1946, %v1945, 0
          %v1951 = vsel %vm1946, %v1944, 0
          %1953 = vmatprep.subr.mxu0 0.0
          %1954 = vmatpush1.xpose.msra.mxu0 0.0
          %1955 = vmatprep.subr.mxu0 0.0
          %1956 = vmatpush1.xpose.msra.mxu0 0.0
          %1957 = vmatprep.subr.mxu0 0.0
          %1958 = vmatpush1.xpose.msra.mxu0 0.0
          %1959 = vmatprep.subr.mxu0 0.0
          %1960 = vmatpush1.xpose.msra.mxu0 0.0
          %1961 = vmatprep.subr.mxu0 0.0
          %1962 = vmatpush1.xpose.msra.mxu0 0.0
          %1963 = vmatprep.subr.mxu0 0.0
          %1964 = vmatpush1.xpose.msra.mxu0 0.0
          %1965 = vmatprep.subr.mxu0 0.0
          %1966 = vmatpush1.xpose.msra.mxu0 0.0
          %1967 = vmatprep.subr.mxu0 0.0
          %1968 = vmatpush1.xpose.msra.mxu0 0.0
          %1969 = vmatprep.subr.mxu0 0.0
          %1970 = vmatpush1.xpose.msra.mxu0 0.0
          %1971 = vmatprep.subr.mxu0 0.0
          %1972 = vmatpush1.xpose.msra.mxu0 0.0
          %1973 = vmatprep.subr.mxu0 0.0
          %1974 = vmatpush1.xpose.msra.mxu0 0.0
          %1975 = vmatprep.subr.mxu0 0.0
          %1976 = vmatpush1.xpose.msra.mxu0 0.0
          %1977 = vmatprep.subr.mxu0 0.0
          %1978 = vmatpush1.xpose.msra.mxu0 0.0
          %1979 = vmatprep.subr.mxu0 0.0
          %1980 = vmatpush1.xpose.msra.mxu0 0.0
          %1981 = vmatprep.subr.mxu0 0.0
          %1982 = vmatpush1.xpose.msra.mxu0 0.0
          %1983 = vmatprep.subr.mxu0 0.0
          %1984 = vmatpush1.xpose.msra.mxu0 %v1951
          %1985 = vmatprep.subr.mxu0 0.0
          %1986 = vmatpush2.xpose.msra.mxu0 0.0
          %1987 = vmatprep.subr.mxu0 0.0
          %1988 = vmatpush2.xpose.msra.mxu0 0.0
          %1989 = vmatprep.subr.mxu0 0.0
          %1990 = vmatpush2.xpose.msra.mxu0 0.0
          %1991 = vmatprep.subr.mxu0 0.0
          %1992 = vmatpush2.xpose.msra.mxu0 0.0
          %1993 = vmatprep.subr.mxu0 0.0
          %1994 = vmatpush2.xpose.msra.mxu0 0.0
          %1995 = vmatprep.subr.mxu0 0.0
          %1996 = vmatpush2.xpose.msra.mxu0 0.0
          %1997 = vmatprep.subr.mxu0 0.0
          %1998 = vmatpush2.xpose.msra.mxu0 0.0
          %1999 = vmatprep.subr.mxu0 0.0
          %2000 = vmatpush2.xpose.msra.mxu0 0.0
          %2001 = vmatprep.subr.mxu0 0.0
          %2002 = vmatpush2.xpose.msra.mxu0 0.0
          %2003 = vmatprep.subr.mxu0 0.0
          %2004 = vmatpush2.xpose.msra.mxu0 0.0
          %2005 = vmatprep.subr.mxu0 0.0
          %2006 = vmatpush2.xpose.msra.mxu0 0.0
          %2007 = vmatprep.subr.mxu0 0.0
          %2008 = vmatpush2.xpose.msra.mxu0 0.0
          %2009 = vmatprep.subr.mxu0 0.0
          %2010 = vmatpush2.xpose.msra.mxu0 0.0
          %2011 = vmatprep.subr.mxu0 0.0
          %2012 = vmatpush2.xpose.msra.mxu0 0.0
          %2013 = vmatprep.subr.mxu0 0.0
          %2014 = vmatpush2.xpose.msra.mxu0 0.0
          %2015 = vmatprep.subr.mxu0 0.0
          %2016 = vmatpush2.xpose.msra.mxu0 0.0
          %2017 = vmatprep.mubr.f32.mxu0 0.0
          %2018 = vmatmul.mubr.f32.gmra.mxu0 %v1948
          %v2019 = vpop.f32.mrf.mxu0
          %v2020 = vadd.f32 0.0, %v2019
          %v2021 = vpop.f32.mrf.mxu0
          %2022 = vdwg.mxu0
          %vm2023 = vcmask 57344
          %2024 = vst.msk [vmem:[#allocation12] sm:$0x1] %vm2023, %v2020
        $region66: #{hdnnp_forward.1} parent=31 // pred_fallthru
          _
        // Predicated region
        $region67: #{hdnnp_forward.1} parent=31 // pred_check
          %p2025 = pneg %p120
        $region68: #{hdnnp_forward.1} parent=31 // pred_check_branch
          %2027 = sbr.rel (%p2025) target = $region70
        $region69: #{hdnnp_forward.1} parent=31 // pred_region
          %s2029 = ssub.s32 16, 16
          %2030 = vsyncadd [#allocation13], %s2029
          %s2032 = sshll.u32 [#allocation12], 4
          %s2033 = int_to_ptr.vmem [resolvable:$true] %s2032
          %2035 = dma.vmem_to_hbm [thread:$0]  %s2033, 16, %s5, [#allocation13]
        $region70: #{hdnnp_forward.1} parent=31 // pred_fallthru
          _
        // Predicated region
        $region71: #{hdnnp_forward.1} parent=31 // pred_check
          %p2036 = pneg %p120
        $region72: #{hdnnp_forward.1} parent=31 // pred_check_branch
          %2038 = sbr.rel (%p2036) target = $region74
        $region73: #{hdnnp_forward.1} parent=31 // pred_region
          %2039 = dma.done [#allocation13], 16
        $region74: #{hdnnp_forward.1} parent=31 // pred_fallthru
          _
      $region32: #{hdnnp_forward.1} parent=5 // pred_fallthru
        _
      %p2040 = scmp.le.s32.totalorder 2, %s22
      // Predicated region
      $region75: #{hdnnp_forward.1} parent=5 // pred_check
        %p2041 = pneg %p2040
      $region76: #{hdnnp_forward.1} parent=5 // pred_check_branch
        %2043 = sbr.rel (%p2041) target = $region78
      $region77: #{hdnnp_forward.1} parent=5 // pred_region
        %s2044 = ssub.s32 %s22, 2
      $region78: #{hdnnp_forward.1} parent=5 // pred_fallthru
        _
    $region6: #{hdnnp_forward.1} parent=1 // loop_footer
      %s26 = sadd.s32 1, %s22
    $region7: #{hdnnp_forward.1} parent=1 // loop_footer_branch
      %21 = sbr.rel target = $region3
    $region8: #{hdnnp_forward.1} parent=1 // loop_exit
      _
    %2045 = vsyncpa [#allocation13], 1
    %s2046 = scalar_lea.sflag [#allocation13], 1
    %2047 = vsyncpa %s2046, 1

</llo_original>
